<compile_context>
chip_gen: v7x
topology: tpu7x:2x2x1
jax: 0.10.0
libtpu: 0.0.40
codegen_flags: <defaults>
</compile_context>

<pallas_src>
import functools

import jax
import jax.numpy as jnp
from jax.experimental import pallas as pl
from jax.experimental.pallas import tpu as pltpu


def _cdiv(a, b):
    return (a + b - 1) // b


def _round_up(x, m):
    return _cdiv(x, m) * m


def _choose_tiling(B, block_b, min_split_batch):
    """Split round_up(B, 8) into near-equal 8-aligned tiles with minimal padding."""
    Bp = _round_up(B, 8)
    n_tiles = _cdiv(Bp, block_b)
    if Bp >= min_split_batch:
        n_tiles = max(n_tiles, 2)       # give both v7x TCs work; ~free on 1-TC chips
    tile_b = _round_up(_cdiv(Bp, n_tiles), 8)
    n_tiles = _cdiv(Bp, tile_b)
    return tile_b, n_tiles, tile_b * n_tiles


def _pgn_kernel(x_ref, w1_ref, b1_ref, w2_ref, b2_ref, out_ref, *, layer1_on_vpu):
    """One batch tile: Linear(d_in->128) + ReLU + Linear(128->n_pad), fused."""
    x = x_ref[...]                                         # (tile_b, d_in) f32
    if layer1_on_vpu:
        # K = d_in is tiny (CartPole: 4): do layer 1 as d_in broadcast-FMAs on
        # the VPU instead of an MXU matmul that would use 4/128 lanes and
        # 4/256 systolic rows.  Frees the vmatmul slot for the second matmul.
        w1 = w1_ref[...].astype(jnp.float32)               # (d_in, 128), cheap cast
        h = b1_ref[...] + x[:, 0:1] * w1[0:1, :]
        for k in range(1, x.shape[1]):
            h = h + x[:, k:k + 1] * w1[k:k + 1, :]
    else:
        h = jnp.dot(x.astype(w1_ref.dtype), w1_ref[...],
                    preferred_element_type=jnp.float32) + b1_ref[...]
    h = jnp.maximum(h, 0.0)                                # ReLU (f32, VPU)
    y = jnp.dot(h.astype(w2_ref.dtype), w2_ref[...],       # MXU, f32 accumulation
                preferred_element_type=jnp.float32) + b2_ref[...]
    out_ref[...] = y                                       # unmasked 128-lane store


def init_pgn_params(key, input_size, n_actions, hidden=128):
    """Deterministic init mimicking torch.nn.Linear default U[-1/sqrt(fan_in), 1/sqrt(fan_in)]."""
    k1, k2, k3, k4 = jax.random.split(key, 4)
    bound1 = 1.0 / jnp.sqrt(jnp.float32(input_size))
    bound2 = 1.0 / jnp.sqrt(jnp.float32(hidden))
    # stored as (in, out): transpose of PyTorch's (out, in) weight
    w1 = jax.random.uniform(k1, (input_size, hidden), jnp.float32, -bound1, bound1)
    b1 = jax.random.uniform(k2, (hidden,), jnp.float32, -bound1, bound1)
    w2 = jax.random.uniform(k3, (hidden, n_actions), jnp.float32, -bound2, bound2)
    b2 = jax.random.uniform(k4, (n_actions,), jnp.float32, -bound2, bound2)
    return w1, b1, w2, b2


def prepare_pgn_params(w1, b1, w2, b2, *, use_bf16=False):
    """One-time weight preparation (padding / reshape / dtype casts).

    Call once at init and again after every optimizer step; pgn_forward does
    no weight work per call.
    """
    d_in, hidden = w1.shape
    n_actions = w2.shape[1]
    n_pad = _round_up(max(n_actions, 128), 128)   # lane-dense output width
    wdt = jnp.bfloat16 if use_bf16 else jnp.float32

    w2p = jnp.zeros((hidden, n_pad), jnp.float32).at[:, :n_actions].set(w2)
    b2p = jnp.zeros((1, n_pad), jnp.float32).at[0, :n_actions].set(b2.reshape(-1))

    return {
        # kernel operands (MXU dtype already applied)
        "w1": w1.astype(wdt),                                 # (d_in, hidden)
        "b1": b1.reshape(1, hidden).astype(jnp.float32),      # (1, hidden)
        "w2": w2p.astype(wdt),                                # (hidden, n_pad)
        "b2": b2p,                                            # (1, n_pad) f32
        # raw f32 copies for the tiny-batch jnp fallback
        "w1_raw": w1.astype(jnp.float32),
        "b1_raw": b1.reshape(1, hidden).astype(jnp.float32),
        "w2_raw": w2.astype(jnp.float32),
        "b2_raw": b2.reshape(1, n_actions).astype(jnp.float32),
        # static metadata
        "d_in": int(d_in), "hidden": int(hidden),
        "n_actions": int(n_actions), "n_pad": int(n_pad),
        "use_bf16": bool(use_bf16),
    }


def pgn_forward(params, x, *, block_b=1024, min_split_batch=256,
                small_batch_threshold=32, return_padded=False):
    """x: (B, input_size) f32 -> logits (B, n_actions) f32
    (or the (Bp, 128)-padded slab if return_padded=True, for downstream fusion)."""
    B, d_in = x.shape
    assert d_in == params["d_in"], "input feature size mismatch"
    hidden, n_pad = params["hidden"], params["n_pad"]
    n_actions = params["n_actions"]

    # Tiny RL-rollout batches: pallas launch + pad/slice overhead dominates;
    # plain XLA GEMV is faster.
    if B <= small_batch_threshold:
        h = jnp.maximum(x @ params["w1_raw"] + params["b1_raw"], 0.0)
        return h @ params["w2_raw"] + params["b2_raw"]

    tile_b, n_tiles, Bp = _choose_tiling(B, block_b, min_split_batch)
    if Bp != B:
        x = jnp.pad(x, ((0, Bp - B), (0, 0)))   # at most n_tiles*8 - 1 dead rows

    layer1_on_vpu = d_in <= 8
    wbytes = 2 if params["use_bf16"] else 4
    cost = pl.CostEstimate(
        flops=2 * Bp * (d_in * hidden + hidden * n_pad),
        transcendentals=0,
        bytes_accessed=(Bp * 4 * (d_in + n_pad)                      # x in, logits out
                        + (d_in * hidden + hidden * n_pad) * wbytes  # weights
                        + (hidden + n_pad) * 4),                     # biases
    )

    out = pl.pallas_call(
        functools.partial(_pgn_kernel, layer1_on_vpu=layer1_on_vpu),
        out_shape=jax.ShapeDtypeStruct((Bp, n_pad), jnp.float32),
        grid=(n_tiles,),
        in_specs=[
            pl.BlockSpec((tile_b, d_in), lambda i: (i, 0)),    # x tiled over batch
            pl.BlockSpec((d_in, hidden), lambda i: (0, 0)),    # w1 resident
            pl.BlockSpec((1, hidden), lambda i: (0, 0)),       # b1 resident
            pl.BlockSpec((hidden, n_pad), lambda i: (0, 0)),   # w2 (lane-padded) resident
            pl.BlockSpec((1, n_pad), lambda i: (0, 0)),        # b2 (lane-padded) resident
        ],
        out_specs=pl.BlockSpec((tile_b, n_pad), lambda i: (i, 0)),
        compiler_params=pltpu.CompilerParams(
            # batch tiles are independent -> megacore sharding on v7x
            dimension_semantics=("parallel",)),
        cost_estimate=cost,
    )(x, params["w1"], params["b1"], params["w2"], params["b2"])

    if return_padded:
        return out                      # consumer slices / fuses lazily
    return out[:B, :n_actions]


if __name__ == "__main__":
    # CartPole-v1: observation dim = 4, actions = 2
    input_size, n_actions = 4, 2

    key = jax.random.PRNGKey(0)
    kx, kp = jax.random.split(key)
    w1, b1, w2, b2 = init_pgn_params(kp, input_size, n_actions)

    def ref_forward(xx):
        return jnp.maximum(xx @ w1 + b1, 0.0) @ w2 + b2

    # f32 path:
    #   batch=8    -> tiny-batch jnp fallback
    #   batch=600  -> 2 tiles of 304 rows (non-divisible B, minimal pad, v7x split)
    #   batch=2500 -> 3 tiles of 840 rows (multi-tile grid)
    params = prepare_pgn_params(w1, b1, w2, b2, use_bf16=False)
    for batch in (8, 600, 2500):
        x = jax.random.normal(jax.random.fold_in(kx, batch),
                              (batch, input_size), jnp.float32)
        out = jax.block_until_ready(pgn_forward(params, x))
        ref = ref_forward(x)
        assert out.shape == (batch, n_actions)
        assert jnp.allclose(out, ref, atol=1e-5, rtol=1e-5), f"f32 mismatch at batch={batch}"

    # bf16 MXU-operand path (f32 accumulation), casts hoisted to prepare step.
    # Looser tolerance vs the f32 reference (bf16 operand rounding).
    params_bf16 = prepare_pgn_params(w1, b1, w2, b2, use_bf16=True)
    xb = jax.random.normal(jax.random.fold_in(kx, 1), (1024, input_size), jnp.float32)
    out_bf16 = jax.block_until_ready(pgn_forward(params_bf16, xb))
    ref_bf16 = ref_forward(xb)
    assert out_bf16.shape == (1024, n_actions)
    assert jnp.allclose(out_bf16, ref_bf16, atol=5e-2, rtol=5e-2), "bf16 mismatch"

    print("KERNEL_OK")
</pallas_src>

<mosaic_0001>
module attributes {stable_mosaic.version = 11 : i64} {
  func.func @_pgn_kernel(%arg0: i32, %arg1: memref<304x4xf32, #tpu.memory_space<vmem>>, %arg2: memref<4x128xf32, #tpu.memory_space<vmem>>, %arg3: memref<1x128xf32, #tpu.memory_space<vmem>>, %arg4: memref<128x128xf32, #tpu.memory_space<vmem>>, %arg5: memref<1x128xf32, #tpu.memory_space<vmem>>, %arg6: memref<304x128xf32, #tpu.memory_space<vmem>>) attributes {dimension_semantics = [#tpu.dimension_semantics<parallel>], iteration_bounds = array<i64: 2>, scalar_prefetch = 0 : i64, scratch_operands = 0 : i64, tpu.core_type = #tpu.core_type<tc>, window_params = [{transform_indices = @transform_0, window_bounds = array<i64: 304, 4>}, {pipeline_mode = #tpu.pipeline_mode<synchronous>, transform_indices = @transform_1, window_bounds = array<i64: 4, 128>}, {pipeline_mode = #tpu.pipeline_mode<synchronous>, transform_indices = @transform_2, window_bounds = array<i64: 1, 128>}, {pipeline_mode = #tpu.pipeline_mode<synchronous>, transform_indices = @transform_3, window_bounds = array<i64: 128, 128>}, {pipeline_mode = #tpu.pipeline_mode<synchronous>, transform_indices = @transform_4, window_bounds = array<i64: 1, 128>}, {transform_indices = @transform_5, window_bounds = array<i64: 304, 128>}]} {
    %c0 = arith.constant 0 : index
    %c0_0 = arith.constant 0 : index
    %0 = vector.load %arg1[%c0, %c0_0] : memref<304x4xf32, #tpu.memory_space<vmem>>, vector<304x4xf32>
    %c0_1 = arith.constant 0 : index
    %c0_2 = arith.constant 0 : index
    %1 = vector.load %arg2[%c0_1, %c0_2] : memref<4x128xf32, #tpu.memory_space<vmem>>, vector<4x128xf32>
    %c0_3 = arith.constant 0 : index
    %c0_4 = arith.constant 0 : index
    %2 = vector.load %arg3[%c0_3, %c0_4] : memref<1x128xf32, #tpu.memory_space<vmem>>, vector<1x128xf32>
    %3 = vector.extract_strided_slice %0 {offsets = [0, 0], sizes = [304, 1], strides = [1, 1]} : vector<304x4xf32> to vector<304x1xf32>
    %4 = vector.extract_strided_slice %1 {offsets = [0, 0], sizes = [1, 128], strides = [1, 1]} : vector<4x128xf32> to vector<1x128xf32>
    %5 = vector.broadcast %3 : vector<304x1xf32> to vector<304x128xf32>
    %6 = vector.broadcast %4 : vector<1x128xf32> to vector<304x128xf32>
    %7 = arith.mulf %5, %6 : vector<304x128xf32>
    %8 = vector.broadcast %2 : vector<1x128xf32> to vector<304x128xf32>
    %9 = arith.addf %8, %7 : vector<304x128xf32>
    %10 = vector.extract_strided_slice %0 {offsets = [0, 1], sizes = [304, 1], strides = [1, 1]} : vector<304x4xf32> to vector<304x1xf32>
    %11 = vector.extract_strided_slice %1 {offsets = [1, 0], sizes = [1, 128], strides = [1, 1]} : vector<4x128xf32> to vector<1x128xf32>
    %12 = vector.broadcast %10 : vector<304x1xf32> to vector<304x128xf32>
    %13 = vector.broadcast %11 : vector<1x128xf32> to vector<304x128xf32>
    %14 = arith.mulf %12, %13 : vector<304x128xf32>
    %15 = arith.addf %9, %14 : vector<304x128xf32>
    %16 = vector.extract_strided_slice %0 {offsets = [0, 2], sizes = [304, 1], strides = [1, 1]} : vector<304x4xf32> to vector<304x1xf32>
    %17 = vector.extract_strided_slice %1 {offsets = [2, 0], sizes = [1, 128], strides = [1, 1]} : vector<4x128xf32> to vector<1x128xf32>
    %18 = vector.broadcast %16 : vector<304x1xf32> to vector<304x128xf32>
    %19 = vector.broadcast %17 : vector<1x128xf32> to vector<304x128xf32>
    %20 = arith.mulf %18, %19 : vector<304x128xf32>
    %21 = arith.addf %15, %20 : vector<304x128xf32>
    %22 = vector.extract_strided_slice %0 {offsets = [0, 3], sizes = [304, 1], strides = [1, 1]} : vector<304x4xf32> to vector<304x1xf32>
    %23 = vector.extract_strided_slice %1 {offsets = [3, 0], sizes = [1, 128], strides = [1, 1]} : vector<4x128xf32> to vector<1x128xf32>
    %24 = vector.broadcast %22 : vector<304x1xf32> to vector<304x128xf32>
    %25 = vector.broadcast %23 : vector<1x128xf32> to vector<304x128xf32>
    %26 = arith.mulf %24, %25 : vector<304x128xf32>
    %27 = arith.addf %21, %26 : vector<304x128xf32>
    %cst = arith.constant 0.000000e+00 : f32
    %28 = vector.broadcast %cst : f32 to vector<304x128xf32>
    %29 = arith.maximumf %27, %28 : vector<304x128xf32>
    %c0_5 = arith.constant 0 : index
    %c0_6 = arith.constant 0 : index
    %30 = vector.load %arg4[%c0_5, %c0_6] : memref<128x128xf32, #tpu.memory_space<vmem>>, vector<128x128xf32>
    %cst_7 = arith.constant dense<0.000000e+00> : vector<304x128xf32>
    %31 = tpu.matmul %29, %30, %cst_7 {dimension_numbers = #tpu.dot_dimension_numbers<[1], [0], [0], [1], [0, 0, 1, 1], [], []>} : vector<304x128xf32>, vector<128x128xf32>, vector<304x128xf32> -> vector<304x128xf32>
    %c0_8 = arith.constant 0 : index
    %c0_9 = arith.constant 0 : index
    %32 = vector.load %arg5[%c0_8, %c0_9] : memref<1x128xf32, #tpu.memory_space<vmem>>, vector<1x128xf32>
    %33 = vector.broadcast %32 : vector<1x128xf32> to vector<304x128xf32>
    %34 = arith.addf %31, %33 : vector<304x128xf32>
    %c0_10 = arith.constant 0 : index
    %c0_11 = arith.constant 0 : index
    %35 = vector.load %arg6[%c0_10, %c0_11] : memref<304x128xf32, #tpu.memory_space<vmem>>, vector<304x128xf32>
    tpu.vector_store %arg6[%c0_10, %c0_11], %34 {strides = array<i32>} : memref<304x128xf32, #tpu.memory_space<vmem>>, vector<304x128xf32>,
    return
  }
  func.func @transform_0(%arg0: i32) -> (i32, i32) {
    %c0_i32 = arith.constant 0 : i32
    %c0_i32_0 = arith.constant 0 : i32
    return %arg0, %c0_i32 : i32, i32
  }
  func.func @transform_1(%arg0: i32) -> (i32, i32) {
    %c0_i32 = arith.constant 0 : i32
    %c0_i32_0 = arith.constant 0 : i32
    %c0_i32_1 = arith.constant 0 : i32
    return %c0_i32, %c0_i32_0 : i32, i32
  }
  func.func @transform_2(%arg0: i32) -> (i32, i32) {
    %c0_i32 = arith.constant 0 : i32
    %c0_i32_0 = arith.constant 0 : i32
    %c0_i32_1 = arith.constant 0 : i32
    return %c0_i32, %c0_i32_0 : i32, i32
  }
  func.func @transform_3(%arg0: i32) -> (i32, i32) {
    %c0_i32 = arith.constant 0 : i32
    %c0_i32_0 = arith.constant 0 : i32
    %c0_i32_1 = arith.constant 0 : i32
    return %c0_i32, %c0_i32_0 : i32, i32
  }
  func.func @transform_4(%arg0: i32) -> (i32, i32) {
    %c0_i32 = arith.constant 0 : i32
    %c0_i32_0 = arith.constant 0 : i32
    %c0_i32_1 = arith.constant 0 : i32
    return %c0_i32, %c0_i32_0 : i32, i32
  }
  func.func @transform_5(%arg0: i32) -> (i32, i32) {
    %c0_i32 = arith.constant 0 : i32
    %c0_i32_0 = arith.constant 0 : i32
    return %arg0, %c0_i32 : i32, i32
  }
}

</mosaic_0001>

<llo_original>
// kernel: tpu_custom_call.1
$region0: #{tpu_custom_call.1}
  #allocation0 [shape = 'u32[]', space=smem, size = 0x4, offset = 0x4, fixed_abs, tag = 'smem constant byte address 0x4 - core index']
  #allocation1 [shape = 'u32[144,128]{1,0:T(1,128)}', space=vmem, size = 0x12000, scoped, tag = 'internal scratch']
  %s0 = inlined_call_operand.vmem [shape: f32[608,4], index: 0, kind: input, shape index: {}]
  %s1 = inlined_call_operand.vmem [shape: f32[4,128], index: 1, kind: input, shape index: {}]
  %s2 = inlined_call_operand.vmem [shape: f32[1,128], index: 2, kind: input, shape index: {}]
  %s3 = inlined_call_operand.vmem [shape: f32[128,128], index: 3, kind: input, shape index: {}]
  %s4 = inlined_call_operand.vmem [shape: f32[1,128], index: 4, kind: input, shape index: {}]
  %s5 = inlined_call_operand.hbm [shape: f32[608,128], index: 5, kind: output, shape index: {}]
  %s6 = sld [smem:[#allocation0]]
  $region53: #{tpu_custom_call.1} parent=0
    _
  %s8 = ssub.s32 1, %s6
  %s9 = scalar_select 0, %s8, %s6
  $region1: #{tpu_custom_call.1} parent=0
    #allocation2 [shape = 'u8[311296]{0}', space=vmem, size = 0x4c000, scoped, tag = 'output window, operand 0']
    #allocation3 [shape = 's32[2]{0}', space=sflag, size = 0x8, scoped, tag = 'scoped memory for tpu_custom_call.1']
    %10 = vsyncpa [#allocation3], 0
    %s11 = scalar_lea.sflag [#allocation3], 1
    %12 = vsyncpa %s11, 0
    loop: start=0, step=1, limit=4
    $region2: #{tpu_custom_call.1} parent=1 // loop_pre_header
      _
    $region3: #{tpu_custom_call.1} parent=1 // loop_header
      %s14 = sphi 0, %s18
      %p15 = scmp.ge.s32.totalorder %s14, 4
      %s24 = sphi 0, %s26
      %s27 = sphi 0, %s24
      %s28 = sphi 0, %s27
      %s44 = sphi 0, %s28
      %s48 = sphi 0, %s48
      %s50 = sphi 0, %s48
      %s51 = sphi 0, %s50
      %s65 = sphi 0, %s51
      %s69 = sphi 0, %s69
      %s71 = sphi 0, %s69
      %s72 = sphi 0, %s71
      %s86 = sphi 0, %s72
      %s90 = sphi 0, %s90
      %s92 = sphi 0, %s90
      %s93 = sphi 0, %s92
      %s107 = sphi 0, %s93
      %s111 = sphi 0, %s111
      %s113 = sphi 0, %s111
      %s114 = sphi 0, %s113
      %s128 = sphi 0, %s114
      %s134 = sphi 0, %s136
      %s137 = sphi 0, %s134
      %s138 = sphi 0, %s137
      %s154 = sphi 0, %s138
    $region4: #{tpu_custom_call.1} parent=1 // loop_header_branch
      %17 = sbr.rel (%p15) target = $region8
    $region5: #{tpu_custom_call.1} parent=1 // loop_body
      %s19 = ssub.s32 %s14, 1
      %s20 = ssub.s32 %s14, 2
      %s21 = sadd.s32 %s14, 1
      %s22 = ssub.s32 %s14, %s21
      %p23 = scmp.eq.s32.totalorder %s22, 0
      %s25 = sadd.s32 %s24, 1
      %s26 = scalar_select %p23, %s24, %s25
      %p29 = pneg %p23
      %p30 = scmp.eq.s32.totalorder %s14, 1
      %p31 = por %p29, %p30
      %p32 = scmp.ne.s32.totalorder %s24, %s27
      %p33 = scmp.eq.s32.totalorder %s14, 0
      %p34 = por %p32, %p33
      %p35 = scmp.ne.s32.totalorder %s24, %s27
      %p36 = scmp.eq.s32.totalorder %s19, 1
      %p37 = por %p35, %p36
      %p38 = scmp.ne.s32.totalorder %s27, %s28
      %p39 = scmp.eq.s32.totalorder %s19, 0
      %p40 = por %p38, %p39
      %p41 = scmp.ne.s32.totalorder %s27, %s28
      %p42 = scmp.eq.s32.totalorder %s20, 1
      %p43 = por %p41, %p42
      %p45 = scmp.ne.s32.totalorder %s28, %s44
      %p46 = scmp.eq.s32.totalorder %s20, 0
      %p47 = por %p45, %p46
      %s49 = sadd.s32 %s48, 1
      %p52 = scmp.eq.s32.totalorder %s14, 1
      %p53 = scmp.ne.s32.totalorder %s48, %s50
      %p54 = scmp.eq.s32.totalorder %s14, 0
      %p55 = por %p53, %p54
      %p56 = scmp.ne.s32.totalorder %s48, %s50
      %p57 = scmp.eq.s32.totalorder %s19, 1
      %p58 = por %p56, %p57
      %p59 = scmp.ne.s32.totalorder %s50, %s51
      %p60 = scmp.eq.s32.totalorder %s19, 0
      %p61 = por %p59, %p60
      %p62 = scmp.ne.s32.totalorder %s50, %s51
      %p63 = scmp.eq.s32.totalorder %s20, 1
      %p64 = por %p62, %p63
      %p66 = scmp.ne.s32.totalorder %s51, %s65
      %p67 = scmp.eq.s32.totalorder %s20, 0
      %p68 = por %p66, %p67
      %s70 = sadd.s32 %s69, 1
      %p73 = scmp.eq.s32.totalorder %s14, 1
      %p74 = scmp.ne.s32.totalorder %s69, %s71
      %p75 = scmp.eq.s32.totalorder %s14, 0
      %p76 = por %p74, %p75
      %p77 = scmp.ne.s32.totalorder %s69, %s71
      %p78 = scmp.eq.s32.totalorder %s19, 1
      %p79 = por %p77, %p78
      %p80 = scmp.ne.s32.totalorder %s71, %s72
      %p81 = scmp.eq.s32.totalorder %s19, 0
      %p82 = por %p80, %p81
      %p83 = scmp.ne.s32.totalorder %s71, %s72
      %p84 = scmp.eq.s32.totalorder %s20, 1
      %p85 = por %p83, %p84
      %p87 = scmp.ne.s32.totalorder %s72, %s86
      %p88 = scmp.eq.s32.totalorder %s20, 0
      %p89 = por %p87, %p88
      %s91 = sadd.s32 %s90, 1
      %p94 = scmp.eq.s32.totalorder %s14, 1
      %p95 = scmp.ne.s32.totalorder %s90, %s92
      %p96 = scmp.eq.s32.totalorder %s14, 0
      %p97 = por %p95, %p96
      %p98 = scmp.ne.s32.totalorder %s90, %s92
      %p99 = scmp.eq.s32.totalorder %s19, 1
      %p100 = por %p98, %p99
      %p101 = scmp.ne.s32.totalorder %s92, %s93
      %p102 = scmp.eq.s32.totalorder %s19, 0
      %p103 = por %p101, %p102
      %p104 = scmp.ne.s32.totalorder %s92, %s93
      %p105 = scmp.eq.s32.totalorder %s20, 1
      %p106 = por %p104, %p105
      %p108 = scmp.ne.s32.totalorder %s93, %s107
      %p109 = scmp.eq.s32.totalorder %s20, 0
      %p110 = por %p108, %p109
      %s112 = sadd.s32 %s111, 1
      %p115 = scmp.eq.s32.totalorder %s14, 1
      %p116 = scmp.ne.s32.totalorder %s111, %s113
      %p117 = scmp.eq.s32.totalorder %s14, 0
      %p118 = por %p116, %p117
      %p119 = scmp.ne.s32.totalorder %s111, %s113
      %p120 = scmp.eq.s32.totalorder %s19, 1
      %p121 = por %p119, %p120
      %p122 = scmp.ne.s32.totalorder %s113, %s114
      %p123 = scmp.eq.s32.totalorder %s19, 0
      %p124 = por %p122, %p123
      %p125 = scmp.ne.s32.totalorder %s113, %s114
      %p126 = scmp.eq.s32.totalorder %s20, 1
      %p127 = por %p125, %p126
      %p129 = scmp.ne.s32.totalorder %s114, %s128
      %p130 = scmp.eq.s32.totalorder %s20, 0
      %p131 = por %p129, %p130
      %s132 = ssub.s32 %s14, %s21
      %p133 = scmp.eq.s32.totalorder %s132, 0
      %s135 = sadd.s32 %s134, 1
      %s136 = scalar_select %p133, %s134, %s135
      %p139 = pneg %p133
      %p140 = scmp.eq.s32.totalorder %s14, 1
      %p141 = por %p139, %p140
      %p142 = scmp.ne.s32.totalorder %s134, %s137
      %p143 = scmp.eq.s32.totalorder %s14, 0
      %p144 = por %p142, %p143
      %p145 = scmp.ne.s32.totalorder %s134, %s137
      %p146 = scmp.eq.s32.totalorder %s19, 1
      %p147 = por %p145, %p146
      %p148 = scmp.ne.s32.totalorder %s137, %s138
      %p149 = scmp.eq.s32.totalorder %s19, 0
      %p150 = por %p148, %p149
      %p151 = scmp.ne.s32.totalorder %s137, %s138
      %p152 = scmp.eq.s32.totalorder %s20, 1
      %p153 = por %p151, %p152
      %p155 = scmp.ne.s32.totalorder %s138, %s154
      %p156 = scmp.eq.s32.totalorder %s20, 0
      %p157 = por %p155, %p156
      %p158 = scmp.le.s32.totalorder 1, %s14
      %p159 = scmp.lt.s32.totalorder %s14, 3
      %p160 = pnand %p158, %p159
      %p161 = pneg %p160
      // Predicated region
      $region9: #{tpu_custom_call.1} parent=5 // pred_check
        _
      $region10: #{tpu_custom_call.1} parent=5 // pred_check_branch
        %163 = sbr.rel (%p160) target = $region12
      $region11: #{tpu_custom_call.1} parent=5 // pred_region
        %s164 = ssub.s32 %s14, 1
        // Predicated region
        $region13: #{tpu_custom_call.1} parent=11 // pred_check
          %p165 = pneg %p61
        $region14: #{tpu_custom_call.1} parent=11 // pred_check_branch
          %167 = sbr.rel (%p165) target = $region16
        $region15: #{tpu_custom_call.1} parent=11 // pred_region
          _
        $region16: #{tpu_custom_call.1} parent=11 // pred_fallthru
          _
        // Predicated region
        $region17: #{tpu_custom_call.1} parent=11 // pred_check
          %p168 = pneg %p82
        $region18: #{tpu_custom_call.1} parent=11 // pred_check_branch
          %170 = sbr.rel (%p168) target = $region20
        $region19: #{tpu_custom_call.1} parent=11 // pred_region
          _
        $region20: #{tpu_custom_call.1} parent=11 // pred_fallthru
          _
        // Predicated region
        $region21: #{tpu_custom_call.1} parent=11 // pred_check
          %p171 = pneg %p103
        $region22: #{tpu_custom_call.1} parent=11 // pred_check_branch
          %173 = sbr.rel (%p171) target = $region24
        $region23: #{tpu_custom_call.1} parent=11 // pred_region
          _
        $region24: #{tpu_custom_call.1} parent=11 // pred_fallthru
          _
        // Predicated region
        $region25: #{tpu_custom_call.1} parent=11 // pred_check
          %p174 = pneg %p124
        $region26: #{tpu_custom_call.1} parent=11 // pred_check_branch
          %176 = sbr.rel (%p174) target = $region28
        $region27: #{tpu_custom_call.1} parent=11 // pred_region
          _
        $region28: #{tpu_custom_call.1} parent=11 // pred_fallthru
          _
      $region12: #{tpu_custom_call.1} parent=5 // pred_fallthru
        _
      %p177 = scmp.lt.s32.totalorder %s14, 2
      // Predicated region
      $region29: #{tpu_custom_call.1} parent=5 // pred_check
        %p178 = pneg %p177
      $region30: #{tpu_custom_call.1} parent=5 // pred_check_branch
        %180 = sbr.rel (%p178) target = $region32
      $region31: #{tpu_custom_call.1} parent=5 // pred_region
        // Predicated region
        $region33: #{tpu_custom_call.1} parent=31 // pred_check
          %p181 = pneg %p34
        $region34: #{tpu_custom_call.1} parent=31 // pred_check_branch
          %183 = sbr.rel (%p181) target = $region36
        $region35: #{tpu_custom_call.1} parent=31 // pred_region
          %s184 = smul.u32 38, %s14
          %p185 = scmp.lt.s32.totalorder %s184, 75
          %s186 = scalar_select %p185, %s184, 75
          %s187 = smul.addr %s186, 8
          %s188 = scalar_lea.vmem %s0, %s187
          %s189 = smul.u32 38, %s14
        $region36: #{tpu_custom_call.1} parent=31 // pred_fallthru
          _
      $region32: #{tpu_custom_call.1} parent=5 // pred_fallthru
        _
      %p190 = scmp.le.s32.totalorder 1, %s14
      %p191 = scmp.lt.s32.totalorder %s14, 3
      %p192 = pnand %p190, %p191
      %p193 = pneg %p192
      // Predicated region
      $region37: #{tpu_custom_call.1} parent=5 // pred_check
        _
      $region38: #{tpu_custom_call.1} parent=5 // pred_check_branch
        %195 = sbr.rel (%p192) target = $region40
      $region39: #{tpu_custom_call.1} parent=5 // pred_region
        %s196 = ssub.s32 %s14, 1
        %s197 = smul.u32 38, %s19
        %p198 = scmp.lt.s32.totalorder %s197, 75
        %s199 = scalar_select %p198, %s197, 75
        %s200 = smul.addr %s199, 8
        %s201 = scalar_lea.vmem %s0, %s200
        %p202 = pneg %p40
        %p203 = pneg %p37
        %p204 = pneg %p61
        %p205 = pneg %p58
        %p206 = pneg %p82
        %p207 = pneg %p79
        %p208 = pneg %p103
        %p209 = pneg %p100
        %p210 = pneg %p124
        %p211 = pneg %p121
        %p212 = pneg %p150
        %p213 = pneg %p147
        %s214 = sand.u32 %s137, 1
        %s215 = scalar_lea.sflag [#allocation3], %s214
        %s216 = sand.u32 %s137, 1
        %s217 = smul.addr %s216, 304
        %s218 = scalar_lea.vmem [#allocation2], %s217
        %s219 = smul.u32 38, %s19
        %p220 = scmp.lt.s32.totalorder %s219, 75
        %s221 = scalar_select %p220, %s219, 75
        %s222 = smul.addr %s221, 8
        %s223 = scalar_lea.vmem %s0, %s222
        %s224 = smul.u32 38, %s19
        %s225 = smul.u32 38, %s19
        %v226 = vld [vmem:[%s223] sm:$0xff]
        %v227 = vld [vmem:[%s223 + $0x8] sm:$0xff]
        %v228 = vld [vmem:[%s223 + $0x10] sm:$0xff]
        %v229 = vld [vmem:[%s223 + $0x18] sm:$0xff]
        %v230 = vld [vmem:[%s223 + $0x20] sm:$0xff]
        %v231 = vld [vmem:[%s223 + $0x28] sm:$0xff]
        %v232 = vld [vmem:[%s223 + $0x30] sm:$0xff]
        %v233 = vld [vmem:[%s223 + $0x38] sm:$0xff]
        %v234 = vld [vmem:[%s223 + $0x40] sm:$0xff]
        %v235 = vld [vmem:[%s223 + $0x48] sm:$0xff]
        %v236 = vld [vmem:[%s223 + $0x50] sm:$0xff]
        %v237 = vld [vmem:[%s223 + $0x58] sm:$0xff]
        %v238 = vld [vmem:[%s223 + $0x60] sm:$0xff]
        %v239 = vld [vmem:[%s223 + $0x68] sm:$0xff]
        %v240 = vld [vmem:[%s223 + $0x70] sm:$0xff]
        %v241 = vld [vmem:[%s223 + $0x78] sm:$0xff]
        %v242 = vld [vmem:[%s223 + $0x80] sm:$0xff]
        %v243 = vld [vmem:[%s223 + $0x88] sm:$0xff]
        %v244 = vld [vmem:[%s223 + $0x90] sm:$0xff]
        %v245 = vld [vmem:[%s223 + $0x98] sm:$0xff]
        %v246 = vld [vmem:[%s223 + $0xa0] sm:$0xff]
        %v247 = vld [vmem:[%s223 + $0xa8] sm:$0xff]
        %v248 = vld [vmem:[%s223 + $0xb0] sm:$0xff]
        %v249 = vld [vmem:[%s223 + $0xb8] sm:$0xff]
        %v250 = vld [vmem:[%s223 + $0xc0] sm:$0xff]
        %v251 = vld [vmem:[%s223 + $0xc8] sm:$0xff]
        %v252 = vld [vmem:[%s223 + $0xd0] sm:$0xff]
        %v253 = vld [vmem:[%s223 + $0xd8] sm:$0xff]
        %v254 = vld [vmem:[%s223 + $0xe0] sm:$0xff]
        %v255 = vld [vmem:[%s223 + $0xe8] sm:$0xff]
        %v256 = vld [vmem:[%s223 + $0xf0] sm:$0xff]
        %v257 = vld [vmem:[%s223 + $0xf8] sm:$0xff]
        %v258 = vld [vmem:[%s223 + $0x100] sm:$0xff]
        %v259 = vld [vmem:[%s223 + $0x108] sm:$0xff]
        %v260 = vld [vmem:[%s223 + $0x110] sm:$0xff]
        %v261 = vld [vmem:[%s223 + $0x118] sm:$0xff]
        %v262 = vld [vmem:[%s223 + $0x120] sm:$0xff]
        %v263 = vld [vmem:[%s223 + $0x128] sm:$0xff]
        %v264 = vld [vmem:[%s1] sm:$0xf]
        %v265 = vld [vmem:[%s2] sm:$0x1]
        %267 = vset.pattern.permute.xlu0 0
        %268 = vperm.xlu0 %267, %v226
        %v269 = vpop.permute.xlu0 %268
        %272 = vset.pattern.permute.xlu0 0
        %273 = vperm.xlu0 %272, %v227
        %v274 = vpop.permute.xlu0 %273
        %277 = vset.pattern.permute.xlu0 0
        %278 = vperm.xlu0 %277, %v228
        %v279 = vpop.permute.xlu0 %278
        %282 = vset.pattern.permute.xlu0 0
        %283 = vperm.xlu0 %282, %v229
        %v284 = vpop.permute.xlu0 %283
        %287 = vset.pattern.permute.xlu0 0
        %288 = vperm.xlu0 %287, %v230
        %v289 = vpop.permute.xlu0 %288
        %292 = vset.pattern.permute.xlu0 0
        %293 = vperm.xlu0 %292, %v231
        %v294 = vpop.permute.xlu0 %293
        %297 = vset.pattern.permute.xlu0 0
        %298 = vperm.xlu0 %297, %v232
        %v299 = vpop.permute.xlu0 %298
        %302 = vset.pattern.permute.xlu0 0
        %303 = vperm.xlu0 %302, %v233
        %v304 = vpop.permute.xlu0 %303
        %307 = vset.pattern.permute.xlu0 0
        %308 = vperm.xlu0 %307, %v234
        %v309 = vpop.permute.xlu0 %308
        %312 = vset.pattern.permute.xlu0 0
        %313 = vperm.xlu0 %312, %v235
        %v314 = vpop.permute.xlu0 %313
        %317 = vset.pattern.permute.xlu0 0
        %318 = vperm.xlu0 %317, %v236
        %v319 = vpop.permute.xlu0 %318
        %322 = vset.pattern.permute.xlu0 0
        %323 = vperm.xlu0 %322, %v237
        %v324 = vpop.permute.xlu0 %323
        %327 = vset.pattern.permute.xlu0 0
        %328 = vperm.xlu0 %327, %v238
        %v329 = vpop.permute.xlu0 %328
        %332 = vset.pattern.permute.xlu0 0
        %333 = vperm.xlu0 %332, %v239
        %v334 = vpop.permute.xlu0 %333
        %337 = vset.pattern.permute.xlu0 0
        %338 = vperm.xlu0 %337, %v240
        %v339 = vpop.permute.xlu0 %338
        %342 = vset.pattern.permute.xlu0 0
        %343 = vperm.xlu0 %342, %v241
        %v344 = vpop.permute.xlu0 %343
        %347 = vset.pattern.permute.xlu0 0
        %348 = vperm.xlu0 %347, %v242
        %v349 = vpop.permute.xlu0 %348
        %352 = vset.pattern.permute.xlu0 0
        %353 = vperm.xlu0 %352, %v243
        %v354 = vpop.permute.xlu0 %353
        %357 = vset.pattern.permute.xlu0 0
        %358 = vperm.xlu0 %357, %v244
        %v359 = vpop.permute.xlu0 %358
        %362 = vset.pattern.permute.xlu0 0
        %363 = vperm.xlu0 %362, %v245
        %v364 = vpop.permute.xlu0 %363
        %367 = vset.pattern.permute.xlu0 0
        %368 = vperm.xlu0 %367, %v246
        %v369 = vpop.permute.xlu0 %368
        %372 = vset.pattern.permute.xlu0 0
        %373 = vperm.xlu0 %372, %v247
        %v374 = vpop.permute.xlu0 %373
        %377 = vset.pattern.permute.xlu0 0
        %378 = vperm.xlu0 %377, %v248
        %v379 = vpop.permute.xlu0 %378
        %382 = vset.pattern.permute.xlu0 0
        %383 = vperm.xlu0 %382, %v249
        %v384 = vpop.permute.xlu0 %383
        %387 = vset.pattern.permute.xlu0 0
        %388 = vperm.xlu0 %387, %v250
        %v389 = vpop.permute.xlu0 %388
        %392 = vset.pattern.permute.xlu0 0
        %393 = vperm.xlu0 %392, %v251
        %v394 = vpop.permute.xlu0 %393
        %397 = vset.pattern.permute.xlu0 0
        %398 = vperm.xlu0 %397, %v252
        %v399 = vpop.permute.xlu0 %398
        %402 = vset.pattern.permute.xlu0 0
        %403 = vperm.xlu0 %402, %v253
        %v404 = vpop.permute.xlu0 %403
        %407 = vset.pattern.permute.xlu0 0
        %408 = vperm.xlu0 %407, %v254
        %v409 = vpop.permute.xlu0 %408
        %412 = vset.pattern.permute.xlu0 0
        %413 = vperm.xlu0 %412, %v255
        %v414 = vpop.permute.xlu0 %413
        %417 = vset.pattern.permute.xlu0 0
        %418 = vperm.xlu0 %417, %v256
        %v419 = vpop.permute.xlu0 %418
        %422 = vset.pattern.permute.xlu0 0
        %423 = vperm.xlu0 %422, %v257
        %v424 = vpop.permute.xlu0 %423
        %427 = vset.pattern.permute.xlu0 0
        %428 = vperm.xlu0 %427, %v258
        %v429 = vpop.permute.xlu0 %428
        %432 = vset.pattern.permute.xlu0 0
        %433 = vperm.xlu0 %432, %v259
        %v434 = vpop.permute.xlu0 %433
        %437 = vset.pattern.permute.xlu0 0
        %438 = vperm.xlu0 %437, %v260
        %v439 = vpop.permute.xlu0 %438
        %442 = vset.pattern.permute.xlu0 0
        %443 = vperm.xlu0 %442, %v261
        %v444 = vpop.permute.xlu0 %443
        %447 = vset.pattern.permute.xlu0 0
        %448 = vperm.xlu0 %447, %v262
        %v449 = vpop.permute.xlu0 %448
        %452 = vset.pattern.permute.xlu0 0
        %453 = vperm.xlu0 %452, %v263
        %v454 = vpop.permute.xlu0 %453
        %v456 = vlaneseq
        %v457 = vshrl.u32 %v456, 7
        %v458 = vsub.s32 0, %v457
        %v459 = vrot.slane %v264, %v458
        %v460 = vmul.f32 %v269, %v459
        %v461 = vmul.f32 %v274, %v459
        %v462 = vmul.f32 %v279, %v459
        %v463 = vmul.f32 %v284, %v459
        %v464 = vmul.f32 %v289, %v459
        %v465 = vmul.f32 %v294, %v459
        %v466 = vmul.f32 %v299, %v459
        %v467 = vmul.f32 %v304, %v459
        %v468 = vmul.f32 %v309, %v459
        %v469 = vmul.f32 %v314, %v459
        %v470 = vmul.f32 %v319, %v459
        %v471 = vmul.f32 %v324, %v459
        %v472 = vmul.f32 %v329, %v459
        %v473 = vmul.f32 %v334, %v459
        %v474 = vmul.f32 %v339, %v459
        %v475 = vmul.f32 %v344, %v459
        %v476 = vmul.f32 %v349, %v459
        %v477 = vmul.f32 %v354, %v459
        %v478 = vmul.f32 %v359, %v459
        %v479 = vmul.f32 %v364, %v459
        %v480 = vmul.f32 %v369, %v459
        %v481 = vmul.f32 %v374, %v459
        %v482 = vmul.f32 %v379, %v459
        %v483 = vmul.f32 %v384, %v459
        %v484 = vmul.f32 %v389, %v459
        %v485 = vmul.f32 %v394, %v459
        %v486 = vmul.f32 %v399, %v459
        %v487 = vmul.f32 %v404, %v459
        %v488 = vmul.f32 %v409, %v459
        %v489 = vmul.f32 %v414, %v459
        %v490 = vmul.f32 %v419, %v459
        %v491 = vmul.f32 %v424, %v459
        %v492 = vmul.f32 %v429, %v459
        %v493 = vmul.f32 %v434, %v459
        %v494 = vmul.f32 %v439, %v459
        %v495 = vmul.f32 %v444, %v459
        %v496 = vmul.f32 %v449, %v459
        %v497 = vmul.f32 %v454, %v459
        %v499 = vlaneseq
        %v500 = vshrl.u32 %v499, 7
        %v501 = vsub.s32 0, %v500
        %v502 = vrot.slane %v265, %v501
        %v504 = vadd.f32 %v502, %v460
        %v505 = vadd.f32 %v502, %v461
        %v506 = vadd.f32 %v502, %v462
        %v507 = vadd.f32 %v502, %v463
        %v508 = vadd.f32 %v502, %v464
        %v509 = vadd.f32 %v502, %v465
        %v510 = vadd.f32 %v502, %v466
        %v511 = vadd.f32 %v502, %v467
        %v512 = vadd.f32 %v502, %v468
        %v513 = vadd.f32 %v502, %v469
        %v514 = vadd.f32 %v502, %v470
        %v515 = vadd.f32 %v502, %v471
        %v516 = vadd.f32 %v502, %v472
        %v517 = vadd.f32 %v502, %v473
        %v518 = vadd.f32 %v502, %v474
        %v519 = vadd.f32 %v502, %v475
        %v520 = vadd.f32 %v502, %v476
        %v521 = vadd.f32 %v502, %v477
        %v522 = vadd.f32 %v502, %v478
        %v523 = vadd.f32 %v502, %v479
        %v524 = vadd.f32 %v502, %v480
        %v525 = vadd.f32 %v502, %v481
        %v526 = vadd.f32 %v502, %v482
        %v527 = vadd.f32 %v502, %v483
        %v528 = vadd.f32 %v502, %v484
        %v529 = vadd.f32 %v502, %v485
        %v530 = vadd.f32 %v502, %v486
        %v531 = vadd.f32 %v502, %v487
        %v532 = vadd.f32 %v502, %v488
        %v533 = vadd.f32 %v502, %v489
        %v534 = vadd.f32 %v502, %v490
        %v535 = vadd.f32 %v502, %v491
        %v536 = vadd.f32 %v502, %v492
        %v537 = vadd.f32 %v502, %v493
        %v538 = vadd.f32 %v502, %v494
        %v539 = vadd.f32 %v502, %v495
        %v540 = vadd.f32 %v502, %v496
        %v541 = vadd.f32 %v502, %v497
        %542 = vset.pattern.permute.xlu0 1
        %543 = vperm.xlu0 %542, %v226
        %v544 = vpop.permute.xlu0 %543
        %546 = vset.pattern.permute.xlu0 1
        %547 = vperm.xlu0 %546, %v227
        %v548 = vpop.permute.xlu0 %547
        %550 = vset.pattern.permute.xlu0 1
        %551 = vperm.xlu0 %550, %v228
        %v552 = vpop.permute.xlu0 %551
        %554 = vset.pattern.permute.xlu0 1
        %555 = vperm.xlu0 %554, %v229
        %v556 = vpop.permute.xlu0 %555
        %558 = vset.pattern.permute.xlu0 1
        %559 = vperm.xlu0 %558, %v230
        %v560 = vpop.permute.xlu0 %559
        %562 = vset.pattern.permute.xlu0 1
        %563 = vperm.xlu0 %562, %v231
        %v564 = vpop.permute.xlu0 %563
        %566 = vset.pattern.permute.xlu0 1
        %567 = vperm.xlu0 %566, %v232
        %v568 = vpop.permute.xlu0 %567
        %570 = vset.pattern.permute.xlu0 1
        %571 = vperm.xlu0 %570, %v233
        %v572 = vpop.permute.xlu0 %571
        %574 = vset.pattern.permute.xlu0 1
        %575 = vperm.xlu0 %574, %v234
        %v576 = vpop.permute.xlu0 %575
        %578 = vset.pattern.permute.xlu0 1
        %579 = vperm.xlu0 %578, %v235
        %v580 = vpop.permute.xlu0 %579
        %582 = vset.pattern.permute.xlu0 1
        %583 = vperm.xlu0 %582, %v236
        %v584 = vpop.permute.xlu0 %583
        %586 = vset.pattern.permute.xlu0 1
        %587 = vperm.xlu0 %586, %v237
        %v588 = vpop.permute.xlu0 %587
        %590 = vset.pattern.permute.xlu0 1
        %591 = vperm.xlu0 %590, %v238
        %v592 = vpop.permute.xlu0 %591
        %594 = vset.pattern.permute.xlu0 1
        %595 = vperm.xlu0 %594, %v239
        %v596 = vpop.permute.xlu0 %595
        %598 = vset.pattern.permute.xlu0 1
        %599 = vperm.xlu0 %598, %v240
        %v600 = vpop.permute.xlu0 %599
        %602 = vset.pattern.permute.xlu0 1
        %603 = vperm.xlu0 %602, %v241
        %v604 = vpop.permute.xlu0 %603
        %606 = vset.pattern.permute.xlu0 1
        %607 = vperm.xlu0 %606, %v242
        %v608 = vpop.permute.xlu0 %607
        %610 = vset.pattern.permute.xlu0 1
        %611 = vperm.xlu0 %610, %v243
        %v612 = vpop.permute.xlu0 %611
        %614 = vset.pattern.permute.xlu0 1
        %615 = vperm.xlu0 %614, %v244
        %v616 = vpop.permute.xlu0 %615
        %618 = vset.pattern.permute.xlu0 1
        %619 = vperm.xlu0 %618, %v245
        %v620 = vpop.permute.xlu0 %619
        %622 = vset.pattern.permute.xlu0 1
        %623 = vperm.xlu0 %622, %v246
        %v624 = vpop.permute.xlu0 %623
        %626 = vset.pattern.permute.xlu0 1
        %627 = vperm.xlu0 %626, %v247
        %v628 = vpop.permute.xlu0 %627
        %630 = vset.pattern.permute.xlu0 1
        %631 = vperm.xlu0 %630, %v248
        %v632 = vpop.permute.xlu0 %631
        %634 = vset.pattern.permute.xlu0 1
        %635 = vperm.xlu0 %634, %v249
        %v636 = vpop.permute.xlu0 %635
        %638 = vset.pattern.permute.xlu0 1
        %639 = vperm.xlu0 %638, %v250
        %v640 = vpop.permute.xlu0 %639
        %642 = vset.pattern.permute.xlu0 1
        %643 = vperm.xlu0 %642, %v251
        %v644 = vpop.permute.xlu0 %643
        %646 = vset.pattern.permute.xlu0 1
        %647 = vperm.xlu0 %646, %v252
        %v648 = vpop.permute.xlu0 %647
        %650 = vset.pattern.permute.xlu0 1
        %651 = vperm.xlu0 %650, %v253
        %v652 = vpop.permute.xlu0 %651
        %654 = vset.pattern.permute.xlu0 1
        %655 = vperm.xlu0 %654, %v254
        %v656 = vpop.permute.xlu0 %655
        %658 = vset.pattern.permute.xlu0 1
        %659 = vperm.xlu0 %658, %v255
        %v660 = vpop.permute.xlu0 %659
        %662 = vset.pattern.permute.xlu0 1
        %663 = vperm.xlu0 %662, %v256
        %v664 = vpop.permute.xlu0 %663
        %666 = vset.pattern.permute.xlu0 1
        %667 = vperm.xlu0 %666, %v257
        %v668 = vpop.permute.xlu0 %667
        %670 = vset.pattern.permute.xlu0 1
        %671 = vperm.xlu0 %670, %v258
        %v672 = vpop.permute.xlu0 %671
        %674 = vset.pattern.permute.xlu0 1
        %675 = vperm.xlu0 %674, %v259
        %v676 = vpop.permute.xlu0 %675
        %678 = vset.pattern.permute.xlu0 1
        %679 = vperm.xlu0 %678, %v260
        %v680 = vpop.permute.xlu0 %679
        %682 = vset.pattern.permute.xlu0 1
        %683 = vperm.xlu0 %682, %v261
        %v684 = vpop.permute.xlu0 %683
        %686 = vset.pattern.permute.xlu0 1
        %687 = vperm.xlu0 %686, %v262
        %v688 = vpop.permute.xlu0 %687
        %690 = vset.pattern.permute.xlu0 1
        %691 = vperm.xlu0 %690, %v263
        %v692 = vpop.permute.xlu0 %691
        %v694 = vlaneseq
        %v695 = vshrl.u32 %v694, 7
        %v696 = vsub.s32 1, %v695
        %v697 = vrot.slane %v264, %v696
        %v698 = vmul.f32 %v544, %v697
        %v699 = vmul.f32 %v548, %v697
        %v700 = vmul.f32 %v552, %v697
        %v701 = vmul.f32 %v556, %v697
        %v702 = vmul.f32 %v560, %v697
        %v703 = vmul.f32 %v564, %v697
        %v704 = vmul.f32 %v568, %v697
        %v705 = vmul.f32 %v572, %v697
        %v706 = vmul.f32 %v576, %v697
        %v707 = vmul.f32 %v580, %v697
        %v708 = vmul.f32 %v584, %v697
        %v709 = vmul.f32 %v588, %v697
        %v710 = vmul.f32 %v592, %v697
        %v711 = vmul.f32 %v596, %v697
        %v712 = vmul.f32 %v600, %v697
        %v713 = vmul.f32 %v604, %v697
        %v714 = vmul.f32 %v608, %v697
        %v715 = vmul.f32 %v612, %v697
        %v716 = vmul.f32 %v616, %v697
        %v717 = vmul.f32 %v620, %v697
        %v718 = vmul.f32 %v624, %v697
        %v719 = vmul.f32 %v628, %v697
        %v720 = vmul.f32 %v632, %v697
        %v721 = vmul.f32 %v636, %v697
        %v722 = vmul.f32 %v640, %v697
        %v723 = vmul.f32 %v644, %v697
        %v724 = vmul.f32 %v648, %v697
        %v725 = vmul.f32 %v652, %v697
        %v726 = vmul.f32 %v656, %v697
        %v727 = vmul.f32 %v660, %v697
        %v728 = vmul.f32 %v664, %v697
        %v729 = vmul.f32 %v668, %v697
        %v730 = vmul.f32 %v672, %v697
        %v731 = vmul.f32 %v676, %v697
        %v732 = vmul.f32 %v680, %v697
        %v733 = vmul.f32 %v684, %v697
        %v734 = vmul.f32 %v688, %v697
        %v735 = vmul.f32 %v692, %v697
        %v736 = vadd.f32 %v504, %v698
        %v737 = vadd.f32 %v505, %v699
        %v738 = vadd.f32 %v506, %v700
        %v739 = vadd.f32 %v507, %v701
        %v740 = vadd.f32 %v508, %v702
        %v741 = vadd.f32 %v509, %v703
        %v742 = vadd.f32 %v510, %v704
        %v743 = vadd.f32 %v511, %v705
        %v744 = vadd.f32 %v512, %v706
        %v745 = vadd.f32 %v513, %v707
        %v746 = vadd.f32 %v514, %v708
        %v747 = vadd.f32 %v515, %v709
        %v748 = vadd.f32 %v516, %v710
        %v749 = vadd.f32 %v517, %v711
        %v750 = vadd.f32 %v518, %v712
        %v751 = vadd.f32 %v519, %v713
        %v752 = vadd.f32 %v520, %v714
        %v753 = vadd.f32 %v521, %v715
        %v754 = vadd.f32 %v522, %v716
        %v755 = vadd.f32 %v523, %v717
        %v756 = vadd.f32 %v524, %v718
        %v757 = vadd.f32 %v525, %v719
        %v758 = vadd.f32 %v526, %v720
        %v759 = vadd.f32 %v527, %v721
        %v760 = vadd.f32 %v528, %v722
        %v761 = vadd.f32 %v529, %v723
        %v762 = vadd.f32 %v530, %v724
        %v763 = vadd.f32 %v531, %v725
        %v764 = vadd.f32 %v532, %v726
        %v765 = vadd.f32 %v533, %v727
        %v766 = vadd.f32 %v534, %v728
        %v767 = vadd.f32 %v535, %v729
        %v768 = vadd.f32 %v536, %v730
        %v769 = vadd.f32 %v537, %v731
        %v770 = vadd.f32 %v538, %v732
        %v771 = vadd.f32 %v539, %v733
        %v772 = vadd.f32 %v540, %v734
        %v773 = vadd.f32 %v541, %v735
        %774 = vset.pattern.permute.xlu0 2
        %775 = vperm.xlu0 %774, %v226
        %v776 = vpop.permute.xlu0 %775
        %778 = vset.pattern.permute.xlu0 2
        %779 = vperm.xlu0 %778, %v227
        %v780 = vpop.permute.xlu0 %779
        %782 = vset.pattern.permute.xlu0 2
        %783 = vperm.xlu0 %782, %v228
        %v784 = vpop.permute.xlu0 %783
        %786 = vset.pattern.permute.xlu0 2
        %787 = vperm.xlu0 %786, %v229
        %v788 = vpop.permute.xlu0 %787
        %790 = vset.pattern.permute.xlu0 2
        %791 = vperm.xlu0 %790, %v230
        %v792 = vpop.permute.xlu0 %791
        %794 = vset.pattern.permute.xlu0 2
        %795 = vperm.xlu0 %794, %v231
        %v796 = vpop.permute.xlu0 %795
        %798 = vset.pattern.permute.xlu0 2
        %799 = vperm.xlu0 %798, %v232
        %v800 = vpop.permute.xlu0 %799
        %802 = vset.pattern.permute.xlu0 2
        %803 = vperm.xlu0 %802, %v233
        %v804 = vpop.permute.xlu0 %803
        %806 = vset.pattern.permute.xlu0 2
        %807 = vperm.xlu0 %806, %v234
        %v808 = vpop.permute.xlu0 %807
        %810 = vset.pattern.permute.xlu0 2
        %811 = vperm.xlu0 %810, %v235
        %v812 = vpop.permute.xlu0 %811
        %814 = vset.pattern.permute.xlu0 2
        %815 = vperm.xlu0 %814, %v236
        %v816 = vpop.permute.xlu0 %815
        %818 = vset.pattern.permute.xlu0 2
        %819 = vperm.xlu0 %818, %v237
        %v820 = vpop.permute.xlu0 %819
        %822 = vset.pattern.permute.xlu0 2
        %823 = vperm.xlu0 %822, %v238
        %v824 = vpop.permute.xlu0 %823
        %826 = vset.pattern.permute.xlu0 2
        %827 = vperm.xlu0 %826, %v239
        %v828 = vpop.permute.xlu0 %827
        %830 = vset.pattern.permute.xlu0 2
        %831 = vperm.xlu0 %830, %v240
        %v832 = vpop.permute.xlu0 %831
        %834 = vset.pattern.permute.xlu0 2
        %835 = vperm.xlu0 %834, %v241
        %v836 = vpop.permute.xlu0 %835
        %838 = vset.pattern.permute.xlu0 2
        %839 = vperm.xlu0 %838, %v242
        %v840 = vpop.permute.xlu0 %839
        %842 = vset.pattern.permute.xlu0 2
        %843 = vperm.xlu0 %842, %v243
        %v844 = vpop.permute.xlu0 %843
        %846 = vset.pattern.permute.xlu0 2
        %847 = vperm.xlu0 %846, %v244
        %v848 = vpop.permute.xlu0 %847
        %850 = vset.pattern.permute.xlu0 2
        %851 = vperm.xlu0 %850, %v245
        %v852 = vpop.permute.xlu0 %851
        %854 = vset.pattern.permute.xlu0 2
        %855 = vperm.xlu0 %854, %v246
        %v856 = vpop.permute.xlu0 %855
        %858 = vset.pattern.permute.xlu0 2
        %859 = vperm.xlu0 %858, %v247
        %v860 = vpop.permute.xlu0 %859
        %862 = vset.pattern.permute.xlu0 2
        %863 = vperm.xlu0 %862, %v248
        %v864 = vpop.permute.xlu0 %863
        %866 = vset.pattern.permute.xlu0 2
        %867 = vperm.xlu0 %866, %v249
        %v868 = vpop.permute.xlu0 %867
        %870 = vset.pattern.permute.xlu0 2
        %871 = vperm.xlu0 %870, %v250
        %v872 = vpop.permute.xlu0 %871
        %874 = vset.pattern.permute.xlu0 2
        %875 = vperm.xlu0 %874, %v251
        %v876 = vpop.permute.xlu0 %875
        %878 = vset.pattern.permute.xlu0 2
        %879 = vperm.xlu0 %878, %v252
        %v880 = vpop.permute.xlu0 %879
        %882 = vset.pattern.permute.xlu0 2
        %883 = vperm.xlu0 %882, %v253
        %v884 = vpop.permute.xlu0 %883
        %886 = vset.pattern.permute.xlu0 2
        %887 = vperm.xlu0 %886, %v254
        %v888 = vpop.permute.xlu0 %887
        %890 = vset.pattern.permute.xlu0 2
        %891 = vperm.xlu0 %890, %v255
        %v892 = vpop.permute.xlu0 %891
        %894 = vset.pattern.permute.xlu0 2
        %895 = vperm.xlu0 %894, %v256
        %v896 = vpop.permute.xlu0 %895
        %898 = vset.pattern.permute.xlu0 2
        %899 = vperm.xlu0 %898, %v257
        %v900 = vpop.permute.xlu0 %899
        %902 = vset.pattern.permute.xlu0 2
        %903 = vperm.xlu0 %902, %v258
        %v904 = vpop.permute.xlu0 %903
        %906 = vset.pattern.permute.xlu0 2
        %907 = vperm.xlu0 %906, %v259
        %v908 = vpop.permute.xlu0 %907
        %910 = vset.pattern.permute.xlu0 2
        %911 = vperm.xlu0 %910, %v260
        %v912 = vpop.permute.xlu0 %911
        %914 = vset.pattern.permute.xlu0 2
        %915 = vperm.xlu0 %914, %v261
        %v916 = vpop.permute.xlu0 %915
        %918 = vset.pattern.permute.xlu0 2
        %919 = vperm.xlu0 %918, %v262
        %v920 = vpop.permute.xlu0 %919
        %922 = vset.pattern.permute.xlu0 2
        %923 = vperm.xlu0 %922, %v263
        %v924 = vpop.permute.xlu0 %923
        %v926 = vlaneseq
        %v927 = vshrl.u32 %v926, 7
        %v928 = vsub.s32 2, %v927
        %v929 = vrot.slane %v264, %v928
        %v930 = vmul.f32 %v776, %v929
        %v931 = vmul.f32 %v780, %v929
        %v932 = vmul.f32 %v784, %v929
        %v933 = vmul.f32 %v788, %v929
        %v934 = vmul.f32 %v792, %v929
        %v935 = vmul.f32 %v796, %v929
        %v936 = vmul.f32 %v800, %v929
        %v937 = vmul.f32 %v804, %v929
        %v938 = vmul.f32 %v808, %v929
        %v939 = vmul.f32 %v812, %v929
        %v940 = vmul.f32 %v816, %v929
        %v941 = vmul.f32 %v820, %v929
        %v942 = vmul.f32 %v824, %v929
        %v943 = vmul.f32 %v828, %v929
        %v944 = vmul.f32 %v832, %v929
        %v945 = vmul.f32 %v836, %v929
        %v946 = vmul.f32 %v840, %v929
        %v947 = vmul.f32 %v844, %v929
        %v948 = vmul.f32 %v848, %v929
        %v949 = vmul.f32 %v852, %v929
        %v950 = vmul.f32 %v856, %v929
        %v951 = vmul.f32 %v860, %v929
        %v952 = vmul.f32 %v864, %v929
        %v953 = vmul.f32 %v868, %v929
        %v954 = vmul.f32 %v872, %v929
        %v955 = vmul.f32 %v876, %v929
        %v956 = vmul.f32 %v880, %v929
        %v957 = vmul.f32 %v884, %v929
        %v958 = vmul.f32 %v888, %v929
        %v959 = vmul.f32 %v892, %v929
        %v960 = vmul.f32 %v896, %v929
        %v961 = vmul.f32 %v900, %v929
        %v962 = vmul.f32 %v904, %v929
        %v963 = vmul.f32 %v908, %v929
        %v964 = vmul.f32 %v912, %v929
        %v965 = vmul.f32 %v916, %v929
        %v966 = vmul.f32 %v920, %v929
        %v967 = vmul.f32 %v924, %v929
        %v968 = vadd.f32 %v736, %v930
        %v969 = vadd.f32 %v737, %v931
        %v970 = vadd.f32 %v738, %v932
        %v971 = vadd.f32 %v739, %v933
        %v972 = vadd.f32 %v740, %v934
        %v973 = vadd.f32 %v741, %v935
        %v974 = vadd.f32 %v742, %v936
        %v975 = vadd.f32 %v743, %v937
        %v976 = vadd.f32 %v744, %v938
        %v977 = vadd.f32 %v745, %v939
        %v978 = vadd.f32 %v746, %v940
        %v979 = vadd.f32 %v747, %v941
        %v980 = vadd.f32 %v748, %v942
        %v981 = vadd.f32 %v749, %v943
        %v982 = vadd.f32 %v750, %v944
        %v983 = vadd.f32 %v751, %v945
        %v984 = vadd.f32 %v752, %v946
        %v985 = vadd.f32 %v753, %v947
        %v986 = vadd.f32 %v754, %v948
        %v987 = vadd.f32 %v755, %v949
        %v988 = vadd.f32 %v756, %v950
        %v989 = vadd.f32 %v757, %v951
        %v990 = vadd.f32 %v758, %v952
        %v991 = vadd.f32 %v759, %v953
        %v992 = vadd.f32 %v760, %v954
        %v993 = vadd.f32 %v761, %v955
        %v994 = vadd.f32 %v762, %v956
        %v995 = vadd.f32 %v763, %v957
        %v996 = vadd.f32 %v764, %v958
        %v997 = vadd.f32 %v765, %v959
        %v998 = vadd.f32 %v766, %v960
        %v999 = vadd.f32 %v767, %v961
        %v1000 = vadd.f32 %v768, %v962
        %v1001 = vadd.f32 %v769, %v963
        %v1002 = vadd.f32 %v770, %v964
        %v1003 = vadd.f32 %v771, %v965
        %v1004 = vadd.f32 %v772, %v966
        %v1005 = vadd.f32 %v773, %v967
        %1006 = vset.pattern.permute.xlu0 3
        %1007 = vperm.xlu0 %1006, %v226
        %v1008 = vpop.permute.xlu0 %1007
        %1010 = vset.pattern.permute.xlu0 3
        %1011 = vperm.xlu0 %1010, %v227
        %v1012 = vpop.permute.xlu0 %1011
        %1014 = vset.pattern.permute.xlu0 3
        %1015 = vperm.xlu0 %1014, %v228
        %v1016 = vpop.permute.xlu0 %1015
        %1018 = vset.pattern.permute.xlu0 3
        %1019 = vperm.xlu0 %1018, %v229
        %v1020 = vpop.permute.xlu0 %1019
        %1022 = vset.pattern.permute.xlu0 3
        %1023 = vperm.xlu0 %1022, %v230
        %v1024 = vpop.permute.xlu0 %1023
        %1026 = vset.pattern.permute.xlu0 3
        %1027 = vperm.xlu0 %1026, %v231
        %v1028 = vpop.permute.xlu0 %1027
        %1030 = vset.pattern.permute.xlu0 3
        %1031 = vperm.xlu0 %1030, %v232
        %v1032 = vpop.permute.xlu0 %1031
        %1034 = vset.pattern.permute.xlu0 3
        %1035 = vperm.xlu0 %1034, %v233
        %v1036 = vpop.permute.xlu0 %1035
        %1038 = vset.pattern.permute.xlu0 3
        %1039 = vperm.xlu0 %1038, %v234
        %v1040 = vpop.permute.xlu0 %1039
        %1042 = vset.pattern.permute.xlu0 3
        %1043 = vperm.xlu0 %1042, %v235
        %v1044 = vpop.permute.xlu0 %1043
        %1046 = vset.pattern.permute.xlu0 3
        %1047 = vperm.xlu0 %1046, %v236
        %v1048 = vpop.permute.xlu0 %1047
        %1050 = vset.pattern.permute.xlu0 3
        %1051 = vperm.xlu0 %1050, %v237
        %v1052 = vpop.permute.xlu0 %1051
        %1054 = vset.pattern.permute.xlu0 3
        %1055 = vperm.xlu0 %1054, %v238
        %v1056 = vpop.permute.xlu0 %1055
        %1058 = vset.pattern.permute.xlu0 3
        %1059 = vperm.xlu0 %1058, %v239
        %v1060 = vpop.permute.xlu0 %1059
        %1062 = vset.pattern.permute.xlu0 3
        %1063 = vperm.xlu0 %1062, %v240
        %v1064 = vpop.permute.xlu0 %1063
        %1066 = vset.pattern.permute.xlu0 3
        %1067 = vperm.xlu0 %1066, %v241
        %v1068 = vpop.permute.xlu0 %1067
        %1070 = vset.pattern.permute.xlu0 3
        %1071 = vperm.xlu0 %1070, %v242
        %v1072 = vpop.permute.xlu0 %1071
        %1074 = vset.pattern.permute.xlu0 3
        %1075 = vperm.xlu0 %1074, %v243
        %v1076 = vpop.permute.xlu0 %1075
        %1078 = vset.pattern.permute.xlu0 3
        %1079 = vperm.xlu0 %1078, %v244
        %v1080 = vpop.permute.xlu0 %1079
        %1082 = vset.pattern.permute.xlu0 3
        %1083 = vperm.xlu0 %1082, %v245
        %v1084 = vpop.permute.xlu0 %1083
        %1086 = vset.pattern.permute.xlu0 3
        %1087 = vperm.xlu0 %1086, %v246
        %v1088 = vpop.permute.xlu0 %1087
        %1090 = vset.pattern.permute.xlu0 3
        %1091 = vperm.xlu0 %1090, %v247
        %v1092 = vpop.permute.xlu0 %1091
        %1094 = vset.pattern.permute.xlu0 3
        %1095 = vperm.xlu0 %1094, %v248
        %v1096 = vpop.permute.xlu0 %1095
        %1098 = vset.pattern.permute.xlu0 3
        %1099 = vperm.xlu0 %1098, %v249
        %v1100 = vpop.permute.xlu0 %1099
        %1102 = vset.pattern.permute.xlu0 3
        %1103 = vperm.xlu0 %1102, %v250
        %v1104 = vpop.permute.xlu0 %1103
        %1106 = vset.pattern.permute.xlu0 3
        %1107 = vperm.xlu0 %1106, %v251
        %v1108 = vpop.permute.xlu0 %1107
        %1110 = vset.pattern.permute.xlu0 3
        %1111 = vperm.xlu0 %1110, %v252
        %v1112 = vpop.permute.xlu0 %1111
        %1114 = vset.pattern.permute.xlu0 3
        %1115 = vperm.xlu0 %1114, %v253
        %v1116 = vpop.permute.xlu0 %1115
        %1118 = vset.pattern.permute.xlu0 3
        %1119 = vperm.xlu0 %1118, %v254
        %v1120 = vpop.permute.xlu0 %1119
        %1122 = vset.pattern.permute.xlu0 3
        %1123 = vperm.xlu0 %1122, %v255
        %v1124 = vpop.permute.xlu0 %1123
        %1126 = vset.pattern.permute.xlu0 3
        %1127 = vperm.xlu0 %1126, %v256
        %v1128 = vpop.permute.xlu0 %1127
        %1130 = vset.pattern.permute.xlu0 3
        %1131 = vperm.xlu0 %1130, %v257
        %v1132 = vpop.permute.xlu0 %1131
        %1134 = vset.pattern.permute.xlu0 3
        %1135 = vperm.xlu0 %1134, %v258
        %v1136 = vpop.permute.xlu0 %1135
        %1138 = vset.pattern.permute.xlu0 3
        %1139 = vperm.xlu0 %1138, %v259
        %v1140 = vpop.permute.xlu0 %1139
        %1142 = vset.pattern.permute.xlu0 3
        %1143 = vperm.xlu0 %1142, %v260
        %v1144 = vpop.permute.xlu0 %1143
        %1146 = vset.pattern.permute.xlu0 3
        %1147 = vperm.xlu0 %1146, %v261
        %v1148 = vpop.permute.xlu0 %1147
        %1150 = vset.pattern.permute.xlu0 3
        %1151 = vperm.xlu0 %1150, %v262
        %v1152 = vpop.permute.xlu0 %1151
        %1154 = vset.pattern.permute.xlu0 3
        %1155 = vperm.xlu0 %1154, %v263
        %v1156 = vpop.permute.xlu0 %1155
        %v1158 = vlaneseq
        %v1159 = vshrl.u32 %v1158, 7
        %v1160 = vsub.s32 3, %v1159
        %v1161 = vrot.slane %v264, %v1160
        %v1162 = vmul.f32 %v1008, %v1161
        %v1163 = vmul.f32 %v1012, %v1161
        %v1164 = vmul.f32 %v1016, %v1161
        %v1165 = vmul.f32 %v1020, %v1161
        %v1166 = vmul.f32 %v1024, %v1161
        %v1167 = vmul.f32 %v1028, %v1161
        %v1168 = vmul.f32 %v1032, %v1161
        %v1169 = vmul.f32 %v1036, %v1161
        %v1170 = vmul.f32 %v1040, %v1161
        %v1171 = vmul.f32 %v1044, %v1161
        %v1172 = vmul.f32 %v1048, %v1161
        %v1173 = vmul.f32 %v1052, %v1161
        %v1174 = vmul.f32 %v1056, %v1161
        %v1175 = vmul.f32 %v1060, %v1161
        %v1176 = vmul.f32 %v1064, %v1161
        %v1177 = vmul.f32 %v1068, %v1161
        %v1178 = vmul.f32 %v1072, %v1161
        %v1179 = vmul.f32 %v1076, %v1161
        %v1180 = vmul.f32 %v1080, %v1161
        %v1181 = vmul.f32 %v1084, %v1161
        %v1182 = vmul.f32 %v1088, %v1161
        %v1183 = vmul.f32 %v1092, %v1161
        %v1184 = vmul.f32 %v1096, %v1161
        %v1185 = vmul.f32 %v1100, %v1161
        %v1186 = vmul.f32 %v1104, %v1161
        %v1187 = vmul.f32 %v1108, %v1161
        %v1188 = vmul.f32 %v1112, %v1161
        %v1189 = vmul.f32 %v1116, %v1161
        %v1190 = vmul.f32 %v1120, %v1161
        %v1191 = vmul.f32 %v1124, %v1161
        %v1192 = vmul.f32 %v1128, %v1161
        %v1193 = vmul.f32 %v1132, %v1161
        %v1194 = vmul.f32 %v1136, %v1161
        %v1195 = vmul.f32 %v1140, %v1161
        %v1196 = vmul.f32 %v1144, %v1161
        %v1197 = vmul.f32 %v1148, %v1161
        %v1198 = vmul.f32 %v1152, %v1161
        %v1199 = vmul.f32 %v1156, %v1161
        %v1200 = vadd.f32 %v968, %v1162
        %v1201 = vadd.f32 %v969, %v1163
        %v1202 = vadd.f32 %v970, %v1164
        %v1203 = vadd.f32 %v971, %v1165
        %v1204 = vadd.f32 %v972, %v1166
        %v1205 = vadd.f32 %v973, %v1167
        %v1206 = vadd.f32 %v974, %v1168
        %v1207 = vadd.f32 %v975, %v1169
        %v1208 = vadd.f32 %v976, %v1170
        %v1209 = vadd.f32 %v977, %v1171
        %v1210 = vadd.f32 %v978, %v1172
        %v1211 = vadd.f32 %v979, %v1173
        %v1212 = vadd.f32 %v980, %v1174
        %v1213 = vadd.f32 %v981, %v1175
        %v1214 = vadd.f32 %v982, %v1176
        %v1215 = vadd.f32 %v983, %v1177
        %v1216 = vadd.f32 %v984, %v1178
        %v1217 = vadd.f32 %v985, %v1179
        %v1218 = vadd.f32 %v986, %v1180
        %v1219 = vadd.f32 %v987, %v1181
        %v1220 = vadd.f32 %v988, %v1182
        %v1221 = vadd.f32 %v989, %v1183
        %v1222 = vadd.f32 %v990, %v1184
        %v1223 = vadd.f32 %v991, %v1185
        %v1224 = vadd.f32 %v992, %v1186
        %v1225 = vadd.f32 %v993, %v1187
        %v1226 = vadd.f32 %v994, %v1188
        %v1227 = vadd.f32 %v995, %v1189
        %v1228 = vadd.f32 %v996, %v1190
        %v1229 = vadd.f32 %v997, %v1191
        %v1230 = vadd.f32 %v998, %v1192
        %v1231 = vadd.f32 %v999, %v1193
        %v1232 = vadd.f32 %v1000, %v1194
        %v1233 = vadd.f32 %v1001, %v1195
        %v1234 = vadd.f32 %v1002, %v1196
        %v1235 = vadd.f32 %v1003, %v1197
        %v1236 = vadd.f32 %v1004, %v1198
        %v1237 = vadd.f32 %v1005, %v1199
        %v1238 = vmax.f32 %v1200, 0.0
        %v1239 = vmax.f32 %v1201, 0.0
        %v1240 = vmax.f32 %v1202, 0.0
        %v1241 = vmax.f32 %v1203, 0.0
        %v1242 = vmax.f32 %v1204, 0.0
        %v1243 = vmax.f32 %v1205, 0.0
        %v1244 = vmax.f32 %v1206, 0.0
        %v1245 = vmax.f32 %v1207, 0.0
        %v1246 = vmax.f32 %v1208, 0.0
        %v1247 = vmax.f32 %v1209, 0.0
        %v1248 = vmax.f32 %v1210, 0.0
        %v1249 = vmax.f32 %v1211, 0.0
        %v1250 = vmax.f32 %v1212, 0.0
        %v1251 = vmax.f32 %v1213, 0.0
        %v1252 = vmax.f32 %v1214, 0.0
        %v1253 = vmax.f32 %v1215, 0.0
        %v1254 = vmax.f32 %v1216, 0.0
        %v1255 = vmax.f32 %v1217, 0.0
        %v1256 = vmax.f32 %v1218, 0.0
        %v1257 = vmax.f32 %v1219, 0.0
        %v1258 = vmax.f32 %v1220, 0.0
        %v1259 = vmax.f32 %v1221, 0.0
        %v1260 = vmax.f32 %v1222, 0.0
        %v1261 = vmax.f32 %v1223, 0.0
        %v1262 = vmax.f32 %v1224, 0.0
        %v1263 = vmax.f32 %v1225, 0.0
        %v1264 = vmax.f32 %v1226, 0.0
        %v1265 = vmax.f32 %v1227, 0.0
        %v1266 = vmax.f32 %v1228, 0.0
        %v1267 = vmax.f32 %v1229, 0.0
        %v1268 = vmax.f32 %v1230, 0.0
        %v1269 = vmax.f32 %v1231, 0.0
        %v1270 = vmax.f32 %v1232, 0.0
        %v1271 = vmax.f32 %v1233, 0.0
        %v1272 = vmax.f32 %v1234, 0.0
        %v1273 = vmax.f32 %v1235, 0.0
        %v1274 = vmax.f32 %v1236, 0.0
        %v1275 = vmax.f32 %v1237, 0.0
        %v1276 = vld [vmem:[%s3] sm:$0xff]
        %v1277 = vld [vmem:[%s3 + $0x8] sm:$0xff]
        %v1278 = vld [vmem:[%s3 + $0x10] sm:$0xff]
        %v1279 = vld [vmem:[%s3 + $0x18] sm:$0xff]
        %v1280 = vld [vmem:[%s3 + $0x20] sm:$0xff]
        %v1281 = vld [vmem:[%s3 + $0x28] sm:$0xff]
        %v1282 = vld [vmem:[%s3 + $0x30] sm:$0xff]
        %v1283 = vld [vmem:[%s3 + $0x38] sm:$0xff]
        %v1284 = vld [vmem:[%s3 + $0x40] sm:$0xff]
        %v1285 = vld [vmem:[%s3 + $0x48] sm:$0xff]
        %v1286 = vld [vmem:[%s3 + $0x50] sm:$0xff]
        %v1287 = vld [vmem:[%s3 + $0x58] sm:$0xff]
        %v1288 = vld [vmem:[%s3 + $0x60] sm:$0xff]
        %v1289 = vld [vmem:[%s3 + $0x68] sm:$0xff]
        %v1290 = vld [vmem:[%s3 + $0x70] sm:$0xff]
        %v1291 = vld [vmem:[%s3 + $0x78] sm:$0xff]
        %v1292 = vld [vmem:[%s4] sm:$0x1]
        %v1294 = vlaneseq
        %v1295 = vshrl.u32 %v1294, 7
        %v1296 = vsub.s32 0, %v1295
        %v1297 = vrot.slane %v1292, %v1296
        %1299 = vmatprep.subr.mxu0 0.0
        %1300 = vmatpush1.msra.mxu0 %v1276
        %1301 = vmatprep.subr.mxu0 0.0
        %1302 = vmatpush1.msra.mxu0 %v1277
        %1303 = vmatprep.subr.mxu0 0.0
        %1304 = vmatpush1.msra.mxu0 %v1278
        %1305 = vmatprep.subr.mxu0 0.0
        %1306 = vmatpush1.msra.mxu0 %v1279
        %1307 = vmatprep.subr.mxu0 0.0
        %1308 = vmatpush1.msra.mxu0 %v1280
        %1309 = vmatprep.subr.mxu0 0.0
        %1310 = vmatpush1.msra.mxu0 %v1281
        %1311 = vmatprep.subr.mxu0 0.0
        %1312 = vmatpush1.msra.mxu0 %v1282
        %1313 = vmatprep.subr.mxu0 0.0
        %1314 = vmatpush1.msra.mxu0 %v1283
        %1315 = vmatprep.subr.mxu0 0.0
        %1316 = vmatpush1.msra.mxu0 %v1284
        %1317 = vmatprep.subr.mxu0 0.0
        %1318 = vmatpush1.msra.mxu0 %v1285
        %1319 = vmatprep.subr.mxu0 0.0
        %1320 = vmatpush1.msra.mxu0 %v1286
        %1321 = vmatprep.subr.mxu0 0.0
        %1322 = vmatpush1.msra.mxu0 %v1287
        %1323 = vmatprep.subr.mxu0 0.0
        %1324 = vmatpush1.msra.mxu0 %v1288
        %1325 = vmatprep.subr.mxu0 0.0
        %1326 = vmatpush1.msra.mxu0 %v1289
        %1327 = vmatprep.subr.mxu0 0.0
        %1328 = vmatpush1.msra.mxu0 %v1290
        %1329 = vmatprep.subr.mxu0 0.0
        %1330 = vmatpush1.msra.mxu0 %v1291
        %1331 = vmatprep.subr.mxu0 0.0
        %1332 = vmatpush1.msra.mxu0 0.0
        %1333 = vmatprep.subr.mxu0 0.0
        %1334 = vmatpush1.msra.mxu0 0.0
        %1335 = vmatprep.subr.mxu0 0.0
        %1336 = vmatpush1.msra.mxu0 0.0
        %1337 = vmatprep.subr.mxu0 0.0
        %1338 = vmatpush1.msra.mxu0 0.0
        %1339 = vmatprep.subr.mxu0 0.0
        %1340 = vmatpush1.msra.mxu0 0.0
        %1341 = vmatprep.subr.mxu0 0.0
        %1342 = vmatpush1.msra.mxu0 0.0
        %1343 = vmatprep.subr.mxu0 0.0
        %1344 = vmatpush1.msra.mxu0 0.0
        %1345 = vmatprep.subr.mxu0 0.0
        %1346 = vmatpush1.msra.mxu0 0.0
        %1347 = vmatprep.subr.mxu0 0.0
        %1348 = vmatpush1.msra.mxu0 0.0
        %1349 = vmatprep.subr.mxu0 0.0
        %1350 = vmatpush1.msra.mxu0 0.0
        %1351 = vmatprep.subr.mxu0 0.0
        %1352 = vmatpush1.msra.mxu0 0.0
        %1353 = vmatprep.subr.mxu0 0.0
        %1354 = vmatpush1.msra.mxu0 0.0
        %1355 = vmatprep.subr.mxu0 0.0
        %1356 = vmatpush1.msra.mxu0 0.0
        %1357 = vmatprep.subr.mxu0 0.0
        %1358 = vmatpush1.msra.mxu0 0.0
        %1359 = vmatprep.subr.mxu0 0.0
        %1360 = vmatpush1.msra.mxu0 0.0
        %1361 = vmatprep.subr.mxu0 0.0
        %1362 = vmatpush1.msra.mxu0 0.0
        %1363 = vmatprep.mubr.f32.mxu0 0.0
        %1364 = vmatmul.mubr.f32.gmra.mrb[0].mxu0 %v1238
        %v1365 = vpop.f32.mrb[0].mxu0
        %v1366 = vadd.f32 %v1297, %v1365
        %v1367 = vpop.f32.mrb[0].mxu0
        %1368 = vmatprep.mubr.f32.mxu0 0.0
        %1369 = vmatmul.mubr.f32.gmra.mrb[0].mxu0 %v1239
        %v1370 = vpop.f32.mrb[0].mxu0
        %v1371 = vadd.f32 %v1297, %v1370
        %v1372 = vpop.f32.mrb[0].mxu0
        %1373 = vmatprep.mubr.f32.mxu0 0.0
        %1374 = vmatmul.mubr.f32.gmra.mrb[0].mxu0 %v1240
        %v1375 = vpop.f32.mrb[0].mxu0
        %v1376 = vadd.f32 %v1297, %v1375
        %v1377 = vpop.f32.mrb[0].mxu0
        %1378 = vmatprep.mubr.f32.mxu0 0.0
        %1379 = vmatmul.mubr.f32.gmra.mrb[0].mxu0 %v1241
        %v1380 = vpop.f32.mrb[0].mxu0
        %v1381 = vadd.f32 %v1297, %v1380
        %v1382 = vpop.f32.mrb[0].mxu0
        %1383 = vmatprep.mubr.f32.mxu0 0.0
        %1384 = vmatmul.mubr.f32.gmra.mrb[0].mxu0 %v1242
        %v1385 = vpop.f32.mrb[0].mxu0
        %v1386 = vadd.f32 %v1297, %v1385
        %v1387 = vpop.f32.mrb[0].mxu0
        %1388 = vmatprep.mubr.f32.mxu0 0.0
        %1389 = vmatmul.mubr.f32.gmra.mrb[0].mxu0 %v1243
        %v1390 = vpop.f32.mrb[0].mxu0
        %v1391 = vadd.f32 %v1297, %v1390
        %v1392 = vpop.f32.mrb[0].mxu0
        %1393 = vmatprep.mubr.f32.mxu0 0.0
        %1394 = vmatmul.mubr.f32.gmra.mrb[0].mxu0 %v1244
        %v1395 = vpop.f32.mrb[0].mxu0
        %v1396 = vadd.f32 %v1297, %v1395
        %v1397 = vpop.f32.mrb[0].mxu0
        %1398 = vmatprep.mubr.f32.mxu0 0.0
        %1399 = vmatmul.mubr.f32.gmra.mrb[0].mxu0 %v1245
        %v1400 = vpop.f32.mrb[0].mxu0
        %v1401 = vadd.f32 %v1297, %v1400
        %v1402 = vpop.f32.mrb[0].mxu0
        %1403 = vmatprep.mubr.f32.mxu0 0.0
        %1404 = vmatmul.mubr.f32.gmra.mrb[0].mxu0 %v1246
        %v1405 = vpop.f32.mrb[0].mxu0
        %v1406 = vadd.f32 %v1297, %v1405
        %v1407 = vpop.f32.mrb[0].mxu0
        %1408 = vmatprep.mubr.f32.mxu0 0.0
        %1409 = vmatmul.mubr.f32.gmra.mrb[0].mxu0 %v1247
        %v1410 = vpop.f32.mrb[0].mxu0
        %v1411 = vadd.f32 %v1297, %v1410
        %v1412 = vpop.f32.mrb[0].mxu0
        %1413 = vmatprep.mubr.f32.mxu0 0.0
        %1414 = vmatmul.mubr.f32.gmra.mrb[0].mxu0 %v1248
        %v1415 = vpop.f32.mrb[0].mxu0
        %v1416 = vadd.f32 %v1297, %v1415
        %v1417 = vpop.f32.mrb[0].mxu0
        %1418 = vmatprep.mubr.f32.mxu0 0.0
        %1419 = vmatmul.mubr.f32.gmra.mrb[0].mxu0 %v1249
        %v1420 = vpop.f32.mrb[0].mxu0
        %v1421 = vadd.f32 %v1297, %v1420
        %v1422 = vpop.f32.mrb[0].mxu0
        %1423 = vmatprep.mubr.f32.mxu0 0.0
        %1424 = vmatmul.mubr.f32.gmra.mrb[0].mxu0 %v1250
        %v1425 = vpop.f32.mrb[0].mxu0
        %v1426 = vadd.f32 %v1297, %v1425
        %v1427 = vpop.f32.mrb[0].mxu0
        %1428 = vmatprep.mubr.f32.mxu0 0.0
        %1429 = vmatmul.mubr.f32.gmra.mrb[0].mxu0 %v1251
        %v1430 = vpop.f32.mrb[0].mxu0
        %v1431 = vadd.f32 %v1297, %v1430
        %v1432 = vpop.f32.mrb[0].mxu0
        %1433 = vmatprep.mubr.f32.mxu0 0.0
        %1434 = vmatmul.mubr.f32.gmra.mrb[0].mxu0 %v1252
        %v1435 = vpop.f32.mrb[0].mxu0
        %v1436 = vadd.f32 %v1297, %v1435
        %v1437 = vpop.f32.mrb[0].mxu0
        %1438 = vmatprep.mubr.f32.mxu0 0.0
        %1439 = vmatmul.mubr.f32.gmra.mrb[0].mxu0 %v1253
        %v1440 = vpop.f32.mrb[0].mxu0
        %v1441 = vadd.f32 %v1297, %v1440
        %v1442 = vpop.f32.mrb[0].mxu0
        %1443 = vmatprep.mubr.f32.mxu0 0.0
        %1444 = vmatmul.mubr.f32.gmra.mrb[0].mxu0 %v1254
        %v1445 = vpop.f32.mrb[0].mxu0
        %v1446 = vadd.f32 %v1297, %v1445
        %v1447 = vpop.f32.mrb[0].mxu0
        %1448 = vmatprep.mubr.f32.mxu0 0.0
        %1449 = vmatmul.mubr.f32.gmra.mrb[0].mxu0 %v1255
        %v1450 = vpop.f32.mrb[0].mxu0
        %v1451 = vadd.f32 %v1297, %v1450
        %v1452 = vpop.f32.mrb[0].mxu0
        %1453 = vmatprep.mubr.f32.mxu0 0.0
        %1454 = vmatmul.mubr.f32.gmra.mrb[0].mxu0 %v1256
        %v1455 = vpop.f32.mrb[0].mxu0
        %v1456 = vadd.f32 %v1297, %v1455
        %v1457 = vpop.f32.mrb[0].mxu0
        %1458 = vmatprep.mubr.f32.mxu0 0.0
        %1459 = vmatmul.mubr.f32.gmra.mrb[0].mxu0 %v1257
        %v1460 = vpop.f32.mrb[0].mxu0
        %v1461 = vadd.f32 %v1297, %v1460
        %v1462 = vpop.f32.mrb[0].mxu0
        %1463 = vmatprep.mubr.f32.mxu0 0.0
        %1464 = vmatmul.mubr.f32.gmra.mrb[0].mxu0 %v1258
        %v1465 = vpop.f32.mrb[0].mxu0
        %v1466 = vadd.f32 %v1297, %v1465
        %v1467 = vpop.f32.mrb[0].mxu0
        %1468 = vmatprep.mubr.f32.mxu0 0.0
        %1469 = vmatmul.mubr.f32.gmra.mrb[0].mxu0 %v1259
        %v1470 = vpop.f32.mrb[0].mxu0
        %v1471 = vadd.f32 %v1297, %v1470
        %v1472 = vpop.f32.mrb[0].mxu0
        %1473 = vmatprep.mubr.f32.mxu0 0.0
        %1474 = vmatmul.mubr.f32.gmra.mrb[0].mxu0 %v1260
        %v1475 = vpop.f32.mrb[0].mxu0
        %v1476 = vadd.f32 %v1297, %v1475
        %v1477 = vpop.f32.mrb[0].mxu0
        %1478 = vmatprep.mubr.f32.mxu0 0.0
        %1479 = vmatmul.mubr.f32.gmra.mrb[0].mxu0 %v1261
        %v1480 = vpop.f32.mrb[0].mxu0
        %v1481 = vadd.f32 %v1297, %v1480
        %v1482 = vpop.f32.mrb[0].mxu0
        %1483 = vmatprep.mubr.f32.mxu0 0.0
        %1484 = vmatmul.mubr.f32.gmra.mrb[0].mxu0 %v1262
        %v1485 = vpop.f32.mrb[0].mxu0
        %v1486 = vadd.f32 %v1297, %v1485
        %v1487 = vpop.f32.mrb[0].mxu0
        %1488 = vmatprep.mubr.f32.mxu0 0.0
        %1489 = vmatmul.mubr.f32.gmra.mrb[0].mxu0 %v1263
        %v1490 = vpop.f32.mrb[0].mxu0
        %v1491 = vadd.f32 %v1297, %v1490
        %v1492 = vpop.f32.mrb[0].mxu0
        %1493 = vmatprep.mubr.f32.mxu0 0.0
        %1494 = vmatmul.mubr.f32.gmra.mrb[0].mxu0 %v1264
        %v1495 = vpop.f32.mrb[0].mxu0
        %v1496 = vadd.f32 %v1297, %v1495
        %v1497 = vpop.f32.mrb[0].mxu0
        %1498 = vmatprep.mubr.f32.mxu0 0.0
        %1499 = vmatmul.mubr.f32.gmra.mrb[0].mxu0 %v1265
        %v1500 = vpop.f32.mrb[0].mxu0
        %v1501 = vadd.f32 %v1297, %v1500
        %v1502 = vpop.f32.mrb[0].mxu0
        %1503 = vmatprep.mubr.f32.mxu0 0.0
        %1504 = vmatmul.mubr.f32.gmra.mrb[0].mxu0 %v1266
        %v1505 = vpop.f32.mrb[0].mxu0
        %v1506 = vadd.f32 %v1297, %v1505
        %v1507 = vpop.f32.mrb[0].mxu0
        %1508 = vmatprep.mubr.f32.mxu0 0.0
        %1509 = vmatmul.mubr.f32.gmra.mrb[0].mxu0 %v1267
        %v1510 = vpop.f32.mrb[0].mxu0
        %v1511 = vadd.f32 %v1297, %v1510
        %v1512 = vpop.f32.mrb[0].mxu0
        %1513 = vmatprep.mubr.f32.mxu0 0.0
        %1514 = vmatmul.mubr.f32.gmra.mrb[0].mxu0 %v1268
        %v1515 = vpop.f32.mrb[0].mxu0
        %v1516 = vadd.f32 %v1297, %v1515
        %v1517 = vpop.f32.mrb[0].mxu0
        %1518 = vmatprep.mubr.f32.mxu0 0.0
        %1519 = vmatmul.mubr.f32.gmra.mrb[0].mxu0 %v1269
        %v1520 = vpop.f32.mrb[0].mxu0
        %v1521 = vadd.f32 %v1297, %v1520
        %v1522 = vpop.f32.mrb[0].mxu0
        %1523 = vmatprep.mubr.f32.mxu0 0.0
        %1524 = vmatmul.mubr.f32.gmra.mrb[0].mxu0 %v1270
        %v1525 = vpop.f32.mrb[0].mxu0
        %v1526 = vadd.f32 %v1297, %v1525
        %v1527 = vpop.f32.mrb[0].mxu0
        %1528 = vmatprep.mubr.f32.mxu0 0.0
        %1529 = vmatmul.mubr.f32.gmra.mrb[0].mxu0 %v1271
        %v1530 = vpop.f32.mrb[0].mxu0
        %v1531 = vadd.f32 %v1297, %v1530
        %v1532 = vpop.f32.mrb[0].mxu0
        %1533 = vmatprep.mubr.f32.mxu0 0.0
        %1534 = vmatmul.mubr.f32.gmra.mrb[0].mxu0 %v1272
        %v1535 = vpop.f32.mrb[0].mxu0
        %v1536 = vadd.f32 %v1297, %v1535
        %v1537 = vpop.f32.mrb[0].mxu0
        %1538 = vmatprep.mubr.f32.mxu0 0.0
        %1539 = vmatmul.mubr.f32.gmra.mrb[0].mxu0 %v1273
        %v1540 = vpop.f32.mrb[0].mxu0
        %v1541 = vadd.f32 %v1297, %v1540
        %v1542 = vpop.f32.mrb[0].mxu0
        %1543 = vmatprep.mubr.f32.mxu0 0.0
        %1544 = vmatmul.mubr.f32.gmra.mrb[0].mxu0 %v1274
        %v1545 = vpop.f32.mrb[0].mxu0
        %v1546 = vadd.f32 %v1297, %v1545
        %v1547 = vpop.f32.mrb[0].mxu0
        %1548 = vmatprep.mubr.f32.mxu0 0.0
        %1549 = vmatmul.mubr.f32.gmra.mrb[0].mxu0 %v1275
        %v1550 = vpop.f32.mrb[0].mxu0
        %v1551 = vadd.f32 %v1297, %v1550
        %v1552 = vpop.f32.mrb[0].mxu0
        %1553 = vdwg.mxu0
        %1554 = vst [vmem:[%s218] sm:$0xff] %v1366
        %1555 = vst [vmem:[%s218 + $0x8] sm:$0xff] %v1371
        %1556 = vst [vmem:[%s218 + $0x10] sm:$0xff] %v1376
        %1557 = vst [vmem:[%s218 + $0x18] sm:$0xff] %v1381
        %1558 = vst [vmem:[%s218 + $0x20] sm:$0xff] %v1386
        %1559 = vst [vmem:[%s218 + $0x28] sm:$0xff] %v1391
        %1560 = vst [vmem:[%s218 + $0x30] sm:$0xff] %v1396
        %1561 = vst [vmem:[%s218 + $0x38] sm:$0xff] %v1401
        %1562 = vst [vmem:[%s218 + $0x40] sm:$0xff] %v1406
        %1563 = vst [vmem:[%s218 + $0x48] sm:$0xff] %v1411
        %1564 = vst [vmem:[%s218 + $0x50] sm:$0xff] %v1416
        %1565 = vst [vmem:[%s218 + $0x58] sm:$0xff] %v1421
        %1566 = vst [vmem:[%s218 + $0x60] sm:$0xff] %v1426
        %1567 = vst [vmem:[%s218 + $0x68] sm:$0xff] %v1431
        %1568 = vst [vmem:[%s218 + $0x70] sm:$0xff] %v1436
        %1569 = vst [vmem:[%s218 + $0x78] sm:$0xff] %v1441
        %1570 = vst [vmem:[%s218 + $0x80] sm:$0xff] %v1446
        %1571 = vst [vmem:[%s218 + $0x88] sm:$0xff] %v1451
        %1572 = vst [vmem:[%s218 + $0x90] sm:$0xff] %v1456
        %1573 = vst [vmem:[%s218 + $0x98] sm:$0xff] %v1461
        %1574 = vst [vmem:[%s218 + $0xa0] sm:$0xff] %v1466
        %1575 = vst [vmem:[%s218 + $0xa8] sm:$0xff] %v1471
        %1576 = vst [vmem:[%s218 + $0xb0] sm:$0xff] %v1476
        %1577 = vst [vmem:[%s218 + $0xb8] sm:$0xff] %v1481
        %1578 = vst [vmem:[%s218 + $0xc0] sm:$0xff] %v1486
        %1579 = vst [vmem:[%s218 + $0xc8] sm:$0xff] %v1491
        %1580 = vst [vmem:[%s218 + $0xd0] sm:$0xff] %v1496
        %1581 = vst [vmem:[%s218 + $0xd8] sm:$0xff] %v1501
        %1582 = vst [vmem:[%s218 + $0xe0] sm:$0xff] %v1506
        %1583 = vst [vmem:[%s218 + $0xe8] sm:$0xff] %v1511
        %1584 = vst [vmem:[%s218 + $0xf0] sm:$0xff] %v1516
        %1585 = vst [vmem:[%s218 + $0xf8] sm:$0xff] %v1521
        %1586 = vst [vmem:[%s218 + $0x100] sm:$0xff] %v1526
        %1587 = vst [vmem:[%s218 + $0x108] sm:$0xff] %v1531
        %1588 = vst [vmem:[%s218 + $0x110] sm:$0xff] %v1536
        %1589 = vst [vmem:[%s218 + $0x118] sm:$0xff] %v1541
        %1590 = vst [vmem:[%s218 + $0x120] sm:$0xff] %v1546
        %1591 = vst [vmem:[%s218 + $0x128] sm:$0xff] %v1551
        %s1592 = sand.u32 %s137, 1
        %s1593 = scalar_lea.sflag [#allocation3], %s1592
        %s1594 = sand.u32 %s137, 1
        %s1595 = smul.addr %s1594, 304
        %s1596 = scalar_lea.vmem [#allocation2], %s1595
        // Predicated region
        $region41: #{tpu_custom_call.1} parent=39 // pred_check
          %p1597 = pneg %p147
        $region42: #{tpu_custom_call.1} parent=39 // pred_check_branch
          %1599 = sbr.rel (%p1597) target = $region44
        $region43: #{tpu_custom_call.1} parent=39 // pred_region
          %s1600 = smul.u32 38, %s19
          %s1602 = ssub.s32 4864, 4864
          %1603 = vsyncadd %s1593, %s1602
          %s1604 = smul.addr %s1600, 128
          %s1605 = scalar_lea.hbm %s5, %s1604
          %s1606 = sshll.u32 %s1596, 4
          %s1607 = int_to_ptr.vmem [resolvable:$true] %s1606
          %1612 = dma.vmem_to_hbm [thread:$0]  %s1607, 4864, %s1605, %s1593, 128, 128, 8
        $region44: #{tpu_custom_call.1} parent=39 // pred_fallthru
          _
      $region40: #{tpu_custom_call.1} parent=5 // pred_fallthru
        _
      %p1613 = scmp.le.s32.totalorder 2, %s14
      // Predicated region
      $region45: #{tpu_custom_call.1} parent=5 // pred_check
        %p1614 = pneg %p1613
      $region46: #{tpu_custom_call.1} parent=5 // pred_check_branch
        %1616 = sbr.rel (%p1614) target = $region48
      $region47: #{tpu_custom_call.1} parent=5 // pred_region
        %s1617 = ssub.s32 %s14, 2
        // Predicated region
        $region49: #{tpu_custom_call.1} parent=47 // pred_check
          %p1618 = pneg %p153
        $region50: #{tpu_custom_call.1} parent=47 // pred_check_branch
          %1620 = sbr.rel (%p1618) target = $region52
        $region51: #{tpu_custom_call.1} parent=47 // pred_region
          %s1621 = sand.u32 %s138, 1
          %s1622 = scalar_lea.sflag [#allocation3], %s1621
          %s1623 = sand.u32 %s138, 1
          %s1624 = smul.addr %s1623, 304
          %s1625 = scalar_lea.vmem [#allocation2], %s1624
          %1626 = dma.done %s1622, 4864
        $region52: #{tpu_custom_call.1} parent=47 // pred_fallthru
          _
      $region48: #{tpu_custom_call.1} parent=5 // pred_fallthru
        _
    $region6: #{tpu_custom_call.1} parent=1 // loop_footer
      %s18 = sadd.s32 1, %s14
    $region7: #{tpu_custom_call.1} parent=1 // loop_footer_branch
      %13 = sbr.rel target = $region3
    $region8: #{tpu_custom_call.1} parent=1 // loop_exit
      _
    %1627 = vsyncpa [#allocation3], 1
    %s1628 = scalar_lea.sflag [#allocation3], 1
    %1629 = vsyncpa %s1628, 1

</llo_original>
